<compile_context>
chip_gen: v7x
topology: tpu7x:2x2x1
jax: 0.10.0
libtpu: 0.0.40
codegen_flags: <defaults>
</compile_context>

<pallas_src>
import functools
import math

import jax
import jax.numpy as jnp
from jax.experimental import pallas as pl
from jax.experimental.pallas import tpu as pltpu


def _bio_prior_kernel(x_ref, kv_ref, w_ref, b_ref, out_ref, *,
                      batch, num_heads):
    """Whole problem in one grid step.

    x_ref   : (B*Sq,  H)   f32   genomic features (query), batch-flattened
    kv_ref  : (B*Skv, H)   f32   biological prior features (key/value)
    w_ref   : (H, 6H)      bf16  lane-dense [Wq*s | Wk | Wv | Wo | W1 | W2]
    b_ref   : (5, H)       f32   [bq*s, bk, bo_fused, b1, b2] (bv folded in bo)
    out_ref : (B*Sq, H)    f32
    """
    f32 = jnp.float32
    bf16 = jnp.bfloat16

    m, H = x_ref.shape
    sq = m // batch
    skv = kv_ref.shape[0] // batch
    hd = H // num_heads

    x = x_ref[...]                         # f32, reused for the final gating
    xb = x.astype(bf16)
    kvb = kv_ref[...].astype(bf16)
    bias = b_ref[...]                      # (5, H) f32

    # ---- fused full-width projections (bf16 in, f32 accumulation) ----------
    # Scale 1/sqrt(hd) is pre-folded into Wq / bq at pack time.
    q = jnp.dot(xb, w_ref[:, 0:H], preferred_element_type=f32) + bias[0:1, :]
    kv = jnp.dot(kvb, w_ref[:, H:3 * H], preferred_element_type=f32)  # [K|V]
    k = kv[:, 0:H] + bias[1:2, :]
    v = kv[:, H:2 * H]                     # bv folded into bo (rows sum to 1)

    # ---- batched attention: stack per-head lane slices into a batch dim ----
    q3 = q.reshape(batch, sq, H)
    k3 = k.reshape(batch, skv, H)
    v3 = v.reshape(batch, skv, H)
    qh = jnp.stack([q3[:, :, h * hd:(h + 1) * hd] for h in range(num_heads)],
                   axis=0).reshape(num_heads * batch, sq, hd).astype(bf16)
    kh = jnp.stack([k3[:, :, h * hd:(h + 1) * hd] for h in range(num_heads)],
                   axis=0).reshape(num_heads * batch, skv, hd).astype(bf16)
    vh = jnp.stack([v3[:, :, h * hd:(h + 1) * hd] for h in range(num_heads)],
                   axis=0).reshape(num_heads * batch, skv, hd).astype(bf16)

    # One batched score matmul, ONE stacked softmax chain, one batched PV.
    s = jnp.einsum("bqd,bkd->bqk", qh, kh, preferred_element_type=f32)
    s = s - jnp.max(s, axis=-1, keepdims=True)
    p = jnp.exp(s)
    p = p * pl.reciprocal(jnp.sum(p, axis=-1, keepdims=True), approx=True)
    o = jnp.einsum("bqk,bkd->bqd", p.astype(bf16), vh,
                   preferred_element_type=f32)            # (NH*B, Sq, hd) f32

    # ---- reassemble [B*Sq, H] head-concat in registers (no VMEM scratch) ---
    o4 = o.reshape(num_heads, batch, sq, hd)
    ocat = jnp.concatenate([o4[h] for h in range(num_heads)], axis=-1)
    ocat = ocat.reshape(batch * sq, H)

    # ---- output projection + fusion MLP + sigmoid gate ----------------------
    enhanced = (jnp.dot(ocat.astype(bf16), w_ref[:, 3 * H:4 * H],
                        preferred_element_type=f32) + bias[2:3, :])
    h1 = jnp.maximum(
        jnp.dot(enhanced.astype(bf16), w_ref[:, 4 * H:5 * H],
                preferred_element_type=f32) + bias[3:4, :], 0.0)
    z = (jnp.dot(h1.astype(bf16), w_ref[:, 5 * H:6 * H],
                 preferred_element_type=f32) + bias[4:5, :])
    prior = pl.reciprocal(1.0 + jnp.exp(-z), approx=True)  # sigmoid via EUP

    out_ref[...] = (x * (1.0 + prior)).astype(out_ref.dtype)


def bio_prior_forward(genomic, bio, w_slab, b_slab, *, num_heads=8):
    """genomic: [B, Sq, H], bio: [B, Skv, H]; returns [B, Sq, H]."""
    B, Sq, H = genomic.shape
    _, Skv, _ = bio.shape
    x2 = genomic.reshape(B * Sq, H).astype(jnp.float32)
    kv2 = bio.reshape(B * Skv, H).astype(jnp.float32)

    kernel = functools.partial(_bio_prior_kernel, batch=B, num_heads=num_heads)

    # NOTE: at this toy size (B*Sq = 16 rows) one grid step minimizes launch /
    # DMA overhead.  For production batches (especially on v7x with 2 TCs and
    # 64 MiB VMEM) add a leading "parallel" grid axis over row-blocks of B*Sq
    # (~256-512 rows) with constant index maps for the weight/bias slabs.
    out2 = pl.pallas_call(
        kernel,
        out_shape=jax.ShapeDtypeStruct((B * Sq, H), jnp.float32),
        grid_spec=pltpu.PrefetchScalarGridSpec(
            num_scalar_prefetch=0,
            grid=(1,),
            in_specs=[
                pl.BlockSpec((B * Sq, H), lambda i: (0, 0)),       # x
                pl.BlockSpec((B * Skv, H), lambda i: (0, 0)),      # kv
                pl.BlockSpec((H, 6 * H), lambda i: (0, 0)),        # weight slab
                pl.BlockSpec((5, H), lambda i: (0, 0)),            # bias slab
            ],
            out_specs=pl.BlockSpec((B * Sq, H), lambda i: (0, 0)),
        ),
        compiler_params=pltpu.CompilerParams(
            dimension_semantics=("arbitrary",)),
    )(x2, kv2, w_slab, b_slab)
    return out2.reshape(B, Sq, H)


def pack_params(wq, wk, wv, wo, w1, w2, bq, bk, bv, bo, b1, b2, *, num_heads=8):
    """Pack per-matrix f32 params into the kernel's lane-dense 2-slab layout."""
    H = wq.shape[0]
    hd = H // num_heads
    scale = 1.0 / math.sqrt(hd)
    # Exact identity: softmax rows sum to 1 => p @ (kv@Wv + bv) @ Wo
    #               = p @ (kv@Wv) @ Wo + bv @ Wo.   (inference, no attn mask)
    bo_fused = bo + bv @ wo
    w_slab = jnp.concatenate([wq * scale, wk, wv, wo, w1, w2],
                             axis=1).astype(jnp.bfloat16)            # (H, 6H)
    b_slab = jnp.concatenate([bq * scale, bk, bo_fused, b1, b2],
                             axis=0).astype(jnp.float32)             # (5, H)
    return w_slab, b_slab


def bio_prior_reference(genomic, bio, w_slab, b_slab, *, num_heads=8):
    """Pure-JAX reference mirroring the kernel's bf16-matmul / f32-accum math."""
    B, Sq, H = genomic.shape
    _, Skv, _ = bio.shape
    hd = H // num_heads
    f32, bf16 = jnp.float32, jnp.bfloat16

    x2 = genomic.reshape(B * Sq, H).astype(f32)
    kv2 = bio.reshape(B * Skv, H).astype(f32)
    bias = b_slab.astype(f32)
    w = w_slab

    q = jnp.dot(x2.astype(bf16), w[:, 0:H], preferred_element_type=f32) + bias[0]
    kv = jnp.dot(kv2.astype(bf16), w[:, H:3 * H], preferred_element_type=f32)
    k = kv[:, 0:H] + bias[1]
    v = kv[:, H:2 * H]

    q4 = q.reshape(B, Sq, num_heads, hd)
    k4 = k.reshape(B, Skv, num_heads, hd)
    v4 = v.reshape(B, Skv, num_heads, hd)
    s = jnp.einsum("bqhd,bkhd->bhqk", q4.astype(bf16), k4.astype(bf16),
                   preferred_element_type=f32)
    p = jax.nn.softmax(s, axis=-1)
    o = jnp.einsum("bhqk,bkhd->bqhd", p.astype(bf16), v4.astype(bf16),
                   preferred_element_type=f32).reshape(B * Sq, H)

    enhanced = (jnp.dot(o.astype(bf16), w[:, 3 * H:4 * H],
                        preferred_element_type=f32) + bias[2])
    h1 = jax.nn.relu(jnp.dot(enhanced.astype(bf16), w[:, 4 * H:5 * H],
                             preferred_element_type=f32) + bias[3])
    z = jnp.dot(h1.astype(bf16), w[:, 5 * H:6 * H],
                preferred_element_type=f32) + bias[4]
    prior = jax.nn.sigmoid(z)
    return (x2 * (1.0 + prior)).reshape(B, Sq, H)


def _xavier(key, shape, fan_in, fan_out):
    lim = math.sqrt(6.0 / (fan_in + fan_out))
    return jax.random.uniform(key, shape, jnp.float32, -lim, lim)


if __name__ == "__main__":
    # Small, self-consistent shapes: hidden_dim=32, 8 heads -> head_dim 4.
    B, Sq, Sbio = 2, 8, 8
    H, NH = 32, 8
    NUM_GO, NUM_PW = 50, 30

    root = jax.random.PRNGKey(0)
    keys = jax.random.split(root, 20)

    # Embedding tables (xavier-uniform, like reset_parameters).
    go_table = _xavier(keys[0], (NUM_GO, H // 2), NUM_GO, H // 2)
    pw_table = _xavier(keys[1], (NUM_PW, H // 2), NUM_PW, H // 2)

    # MHA + fusion-MLP weights in "apply as x @ W" layout.
    wq = _xavier(keys[2], (H, H), H, H)
    wk = _xavier(keys[3], (H, H), H, H)
    wv = _xavier(keys[4], (H, H), H, H)
    wo = _xavier(keys[5], (H, H), H, H)
    w1 = _xavier(keys[6], (H, H), H, H)
    w2 = _xavier(keys[7], (H, H), H, H)
    # PyTorch init zeros these biases; small random values here exercise the
    # bias paths (the forward pass supports arbitrary learned values).
    bq, bk, bv, bo, b1, b2 = [
        jax.random.uniform(keys[8 + i], (1, H), jnp.float32, -0.1, 0.1)
        for i in range(6)]

    w_slab, b_slab = pack_params(wq, wk, wv, wo, w1, w2,
                                 bq, bk, bv, bo, b1, b2, num_heads=NH)

    # Inputs.
    genomic = jax.random.normal(keys[14], (B, Sq, H), jnp.float32)
    go_ids = jax.random.randint(keys[15], (B, Sbio), 0, NUM_GO)
    pw_ids = jax.random.randint(keys[16], (B, Sbio), 0, NUM_PW)

    # Embedding lookup + concat (index glue, plain JAX gather).
    go_feat = jnp.take(go_table, go_ids, axis=0)                 # [B, Sbio, H/2]
    pw_feat = jnp.take(pw_table, pw_ids, axis=0)                 # [B, Sbio, H/2]
    bio_feat = jnp.concatenate([go_feat, pw_feat], axis=-1)      # [B, Sbio, H]

    # TODO(synk): dropout in prior_fusion / prior_attention is identity (inference mode).
    out = bio_prior_forward(genomic, bio_feat, w_slab, b_slab, num_heads=NH)
    out = jax.block_until_ready(out)

    ref = bio_prior_reference(genomic, bio_feat, w_slab, b_slab, num_heads=NH)
    assert out.shape == (B, Sq, H)
    assert bool(jnp.all(jnp.isfinite(out))), "non-finite output"
    assert jnp.allclose(out, ref, atol=1e-2, rtol=1e-2), "mismatch vs reference"

    print("KERNEL_OK")
</pallas_src>

<mosaic_0001>
module attributes {stable_mosaic.version = 11 : i64} {
  func.func @_bio_prior_kernel(%arg0: i32, %arg1: memref<16x32xf32, #tpu.memory_space<vmem>>, %arg2: memref<16x32xf32, #tpu.memory_space<vmem>>, %arg3: memref<32x192xbf16, #tpu.memory_space<vmem>>, %arg4: memref<5x32xf32, #tpu.memory_space<vmem>>, %arg5: memref<16x32xf32, #tpu.memory_space<vmem>>) attributes {dimension_semantics = [#tpu.dimension_semantics<arbitrary>], iteration_bounds = array<i64: 1>, scalar_prefetch = 0 : i64, scratch_operands = 0 : i64, tpu.core_type = #tpu.core_type<tc>, window_params = [{pipeline_mode = #tpu.pipeline_mode<synchronous>, transform_indices = @transform_0, window_bounds = array<i64: 16, 32>}, {pipeline_mode = #tpu.pipeline_mode<synchronous>, transform_indices = @transform_1, window_bounds = array<i64: 16, 32>}, {pipeline_mode = #tpu.pipeline_mode<synchronous>, transform_indices = @transform_2, window_bounds = array<i64: 32, 192>}, {pipeline_mode = #tpu.pipeline_mode<synchronous>, transform_indices = @transform_3, window_bounds = array<i64: 5, 32>}, {pipeline_mode = #tpu.pipeline_mode<synchronous>, transform_indices = @transform_4, window_bounds = array<i64: 16, 32>}]} {
    %c0 = arith.constant 0 : index
    %c0_0 = arith.constant 0 : index
    %0 = vector.load %arg1[%c0, %c0_0] : memref<16x32xf32, #tpu.memory_space<vmem>>, vector<16x32xf32>
    %1 = arith.truncf %0 : vector<16x32xf32> to vector<16x32xbf16>
    %c0_1 = arith.constant 0 : index
    %c0_2 = arith.constant 0 : index
    %2 = vector.load %arg2[%c0_1, %c0_2] : memref<16x32xf32, #tpu.memory_space<vmem>>, vector<16x32xf32>
    %3 = arith.truncf %2 : vector<16x32xf32> to vector<16x32xbf16>
    %c0_3 = arith.constant 0 : index
    %c0_4 = arith.constant 0 : index
    %4 = vector.load %arg4[%c0_3, %c0_4] : memref<5x32xf32, #tpu.memory_space<vmem>>, vector<5x32xf32>
    %c0_5 = arith.constant 0 : index
    %c0_6 = arith.constant 0 : index
    %5 = vector.load %arg3[%c0_5, %c0_6] : memref<32x192xbf16, #tpu.memory_space<vmem>>, vector<32x32xbf16>
    %cst = arith.constant dense<0.000000e+00> : vector<16x32xf32>
    %6 = tpu.matmul %1, %5, %cst {dimension_numbers = #tpu.dot_dimension_numbers<[1], [0], [0], [1], [0, 0, 1, 1], [], []>} : vector<16x32xbf16>, vector<32x32xbf16>, vector<16x32xf32> -> vector<16x32xf32>
    %7 = vector.extract_strided_slice %4 {offsets = [0, 0], sizes = [1, 32], strides = [1, 1]} : vector<5x32xf32> to vector<1x32xf32>
    %8 = vector.broadcast %7 : vector<1x32xf32> to vector<16x32xf32>
    %9 = arith.addf %6, %8 : vector<16x32xf32>
    %c0_7 = arith.constant 0 : index
    %c32 = arith.constant 32 : index
    %10 = vector.load %arg3[%c0_7, %c32] : memref<32x192xbf16, #tpu.memory_space<vmem>>, vector<32x64xbf16>
    %cst_8 = arith.constant dense<0.000000e+00> : vector<16x64xf32>
    %11 = tpu.matmul %3, %10, %cst_8 {dimension_numbers = #tpu.dot_dimension_numbers<[1], [0], [0], [1], [0, 0, 1, 1], [], []>} : vector<16x32xbf16>, vector<32x64xbf16>, vector<16x64xf32> -> vector<16x64xf32>
    %12 = vector.extract_strided_slice %11 {offsets = [0, 0], sizes = [16, 32], strides = [1, 1]} : vector<16x64xf32> to vector<16x32xf32>
    %13 = vector.extract_strided_slice %4 {offsets = [1, 0], sizes = [1, 32], strides = [1, 1]} : vector<5x32xf32> to vector<1x32xf32>
    %14 = vector.broadcast %13 : vector<1x32xf32> to vector<16x32xf32>
    %15 = arith.addf %12, %14 : vector<16x32xf32>
    %16 = vector.extract_strided_slice %11 {offsets = [0, 32], sizes = [16, 32], strides = [1, 1]} : vector<16x64xf32> to vector<16x32xf32>
    %17 = vector.shape_cast %9 : vector<16x32xf32> to vector<2x8x32xf32>
    %18 = vector.shape_cast %15 : vector<16x32xf32> to vector<2x8x32xf32>
    %19 = vector.shape_cast %16 : vector<16x32xf32> to vector<2x8x32xf32>
    %20 = vector.extract_strided_slice %17 {offsets = [0, 0, 0], sizes = [2, 8, 4], strides = [1, 1, 1]} : vector<2x8x32xf32> to vector<2x8x4xf32>
    %21 = vector.extract_strided_slice %17 {offsets = [0, 0, 4], sizes = [2, 8, 4], strides = [1, 1, 1]} : vector<2x8x32xf32> to vector<2x8x4xf32>
    %22 = vector.extract_strided_slice %17 {offsets = [0, 0, 8], sizes = [2, 8, 4], strides = [1, 1, 1]} : vector<2x8x32xf32> to vector<2x8x4xf32>
    %23 = vector.extract_strided_slice %17 {offsets = [0, 0, 12], sizes = [2, 8, 4], strides = [1, 1, 1]} : vector<2x8x32xf32> to vector<2x8x4xf32>
    %24 = vector.extract_strided_slice %17 {offsets = [0, 0, 16], sizes = [2, 8, 4], strides = [1, 1, 1]} : vector<2x8x32xf32> to vector<2x8x4xf32>
    %25 = vector.extract_strided_slice %17 {offsets = [0, 0, 20], sizes = [2, 8, 4], strides = [1, 1, 1]} : vector<2x8x32xf32> to vector<2x8x4xf32>
    %26 = vector.extract_strided_slice %17 {offsets = [0, 0, 24], sizes = [2, 8, 4], strides = [1, 1, 1]} : vector<2x8x32xf32> to vector<2x8x4xf32>
    %27 = vector.extract_strided_slice %17 {offsets = [0, 0, 28], sizes = [2, 8, 4], strides = [1, 1, 1]} : vector<2x8x32xf32> to vector<2x8x4xf32>
    %28 = vector.shape_cast %20 : vector<2x8x4xf32> to vector<1x2x8x4xf32>
    %29 = vector.shape_cast %21 : vector<2x8x4xf32> to vector<1x2x8x4xf32>
    %30 = vector.shape_cast %22 : vector<2x8x4xf32> to vector<1x2x8x4xf32>
    %31 = vector.shape_cast %23 : vector<2x8x4xf32> to vector<1x2x8x4xf32>
    %32 = vector.shape_cast %24 : vector<2x8x4xf32> to vector<1x2x8x4xf32>
    %33 = vector.shape_cast %25 : vector<2x8x4xf32> to vector<1x2x8x4xf32>
    %34 = vector.shape_cast %26 : vector<2x8x4xf32> to vector<1x2x8x4xf32>
    %35 = vector.shape_cast %27 : vector<2x8x4xf32> to vector<1x2x8x4xf32>
    %36 = tpu.concatenate %28, %29, %30, %31, %32, %33, %34, %35 in 0 : vector<1x2x8x4xf32>, vector<1x2x8x4xf32>, vector<1x2x8x4xf32>, vector<1x2x8x4xf32>, vector<1x2x8x4xf32>, vector<1x2x8x4xf32>, vector<1x2x8x4xf32>, vector<1x2x8x4xf32> -> vector<8x2x8x4xf32>
    %37 = vector.shape_cast %36 : vector<8x2x8x4xf32> to vector<16x8x4xf32>
    %38 = arith.truncf %37 : vector<16x8x4xf32> to vector<16x8x4xbf16>
    %39 = vector.extract_strided_slice %18 {offsets = [0, 0, 0], sizes = [2, 8, 4], strides = [1, 1, 1]} : vector<2x8x32xf32> to vector<2x8x4xf32>
    %40 = vector.extract_strided_slice %18 {offsets = [0, 0, 4], sizes = [2, 8, 4], strides = [1, 1, 1]} : vector<2x8x32xf32> to vector<2x8x4xf32>
    %41 = vector.extract_strided_slice %18 {offsets = [0, 0, 8], sizes = [2, 8, 4], strides = [1, 1, 1]} : vector<2x8x32xf32> to vector<2x8x4xf32>
    %42 = vector.extract_strided_slice %18 {offsets = [0, 0, 12], sizes = [2, 8, 4], strides = [1, 1, 1]} : vector<2x8x32xf32> to vector<2x8x4xf32>
    %43 = vector.extract_strided_slice %18 {offsets = [0, 0, 16], sizes = [2, 8, 4], strides = [1, 1, 1]} : vector<2x8x32xf32> to vector<2x8x4xf32>
    %44 = vector.extract_strided_slice %18 {offsets = [0, 0, 20], sizes = [2, 8, 4], strides = [1, 1, 1]} : vector<2x8x32xf32> to vector<2x8x4xf32>
    %45 = vector.extract_strided_slice %18 {offsets = [0, 0, 24], sizes = [2, 8, 4], strides = [1, 1, 1]} : vector<2x8x32xf32> to vector<2x8x4xf32>
    %46 = vector.extract_strided_slice %18 {offsets = [0, 0, 28], sizes = [2, 8, 4], strides = [1, 1, 1]} : vector<2x8x32xf32> to vector<2x8x4xf32>
    %47 = vector.shape_cast %39 : vector<2x8x4xf32> to vector<1x2x8x4xf32>
    %48 = vector.shape_cast %40 : vector<2x8x4xf32> to vector<1x2x8x4xf32>
    %49 = vector.shape_cast %41 : vector<2x8x4xf32> to vector<1x2x8x4xf32>
    %50 = vector.shape_cast %42 : vector<2x8x4xf32> to vector<1x2x8x4xf32>
    %51 = vector.shape_cast %43 : vector<2x8x4xf32> to vector<1x2x8x4xf32>
    %52 = vector.shape_cast %44 : vector<2x8x4xf32> to vector<1x2x8x4xf32>
    %53 = vector.shape_cast %45 : vector<2x8x4xf32> to vector<1x2x8x4xf32>
    %54 = vector.shape_cast %46 : vector<2x8x4xf32> to vector<1x2x8x4xf32>
    %55 = tpu.concatenate %47, %48, %49, %50, %51, %52, %53, %54 in 0 : vector<1x2x8x4xf32>, vector<1x2x8x4xf32>, vector<1x2x8x4xf32>, vector<1x2x8x4xf32>, vector<1x2x8x4xf32>, vector<1x2x8x4xf32>, vector<1x2x8x4xf32>, vector<1x2x8x4xf32> -> vector<8x2x8x4xf32>
    %56 = vector.shape_cast %55 : vector<8x2x8x4xf32> to vector<16x8x4xf32>
    %57 = arith.truncf %56 : vector<16x8x4xf32> to vector<16x8x4xbf16>
    %58 = vector.extract_strided_slice %19 {offsets = [0, 0, 0], sizes = [2, 8, 4], strides = [1, 1, 1]} : vector<2x8x32xf32> to vector<2x8x4xf32>
    %59 = vector.extract_strided_slice %19 {offsets = [0, 0, 4], sizes = [2, 8, 4], strides = [1, 1, 1]} : vector<2x8x32xf32> to vector<2x8x4xf32>
    %60 = vector.extract_strided_slice %19 {offsets = [0, 0, 8], sizes = [2, 8, 4], strides = [1, 1, 1]} : vector<2x8x32xf32> to vector<2x8x4xf32>
    %61 = vector.extract_strided_slice %19 {offsets = [0, 0, 12], sizes = [2, 8, 4], strides = [1, 1, 1]} : vector<2x8x32xf32> to vector<2x8x4xf32>
    %62 = vector.extract_strided_slice %19 {offsets = [0, 0, 16], sizes = [2, 8, 4], strides = [1, 1, 1]} : vector<2x8x32xf32> to vector<2x8x4xf32>
    %63 = vector.extract_strided_slice %19 {offsets = [0, 0, 20], sizes = [2, 8, 4], strides = [1, 1, 1]} : vector<2x8x32xf32> to vector<2x8x4xf32>
    %64 = vector.extract_strided_slice %19 {offsets = [0, 0, 24], sizes = [2, 8, 4], strides = [1, 1, 1]} : vector<2x8x32xf32> to vector<2x8x4xf32>
    %65 = vector.extract_strided_slice %19 {offsets = [0, 0, 28], sizes = [2, 8, 4], strides = [1, 1, 1]} : vector<2x8x32xf32> to vector<2x8x4xf32>
    %66 = vector.shape_cast %58 : vector<2x8x4xf32> to vector<1x2x8x4xf32>
    %67 = vector.shape_cast %59 : vector<2x8x4xf32> to vector<1x2x8x4xf32>
    %68 = vector.shape_cast %60 : vector<2x8x4xf32> to vector<1x2x8x4xf32>
    %69 = vector.shape_cast %61 : vector<2x8x4xf32> to vector<1x2x8x4xf32>
    %70 = vector.shape_cast %62 : vector<2x8x4xf32> to vector<1x2x8x4xf32>
    %71 = vector.shape_cast %63 : vector<2x8x4xf32> to vector<1x2x8x4xf32>
    %72 = vector.shape_cast %64 : vector<2x8x4xf32> to vector<1x2x8x4xf32>
    %73 = vector.shape_cast %65 : vector<2x8x4xf32> to vector<1x2x8x4xf32>
    %74 = tpu.concatenate %66, %67, %68, %69, %70, %71, %72, %73 in 0 : vector<1x2x8x4xf32>, vector<1x2x8x4xf32>, vector<1x2x8x4xf32>, vector<1x2x8x4xf32>, vector<1x2x8x4xf32>, vector<1x2x8x4xf32>, vector<1x2x8x4xf32>, vector<1x2x8x4xf32> -> vector<8x2x8x4xf32>
    %75 = vector.shape_cast %74 : vector<8x2x8x4xf32> to vector<16x8x4xf32>
    %76 = arith.truncf %75 : vector<16x8x4xf32> to vector<16x8x4xbf16>
    "tpu.trace_start"() <{level = 10 : i32, message = "bqd,bkd->bqk"}> : () -> ()
    %cst_9 = arith.constant dense<0.000000e+00> : vector<16x8x8xf32>
    %77 = tpu.matmul %38, %57, %cst_9 {dimension_numbers = #tpu.dot_dimension_numbers<[2], [2], [1], [1], [0, 0, 0, 1, 1, 1], [0], [0]>} : vector<16x8x4xbf16>, vector<16x8x4xbf16>, vector<16x8x8xf32> -> vector<16x8x8xf32>
    "tpu.trace_stop"() : () -> ()
    %cst_10 = arith.constant dense<0xFF800000> : vector<16x8xf32>
    %78 = vector.multi_reduction <maximumf>, %77, %cst_10 [2] : vector<16x8x8xf32> to vector<16x8xf32>
    %79 = vector.shape_cast %78 : vector<16x8xf32> to vector<16x8x1xf32>
    %80 = vector.broadcast %79 : vector<16x8x1xf32> to vector<16x8x8xf32>
    %81 = arith.subf %77, %80 : vector<16x8x8xf32>
    %82 = math.exp %81 : vector<16x8x8xf32>
    %cst_11 = arith.constant dense<0.000000e+00> : vector<16x8xf32>
    %83 = vector.multi_reduction <add>, %82, %cst_11 [2] : vector<16x8x8xf32> to vector<16x8xf32>
    %84 = vector.shape_cast %83 : vector<16x8xf32> to vector<16x8x1xf32>
    %85 = tpu.reciprocal %84 {approx = true} : vector<16x8x1xf32> -> vector<16x8x1xf32>
    %86 = vector.broadcast %85 : vector<16x8x1xf32> to vector<16x8x8xf32>
    %87 = arith.mulf %82, %86 : vector<16x8x8xf32>
    %88 = arith.truncf %87 : vector<16x8x8xf32> to vector<16x8x8xbf16>
    "tpu.trace_start"() <{level = 10 : i32, message = "bqk,bkd->bqd"}> : () -> ()
    %cst_12 = arith.constant dense<0.000000e+00> : vector<16x8x4xf32>
    %89 = tpu.matmul %88, %76, %cst_12 {dimension_numbers = #tpu.dot_dimension_numbers<[2], [1], [1], [2], [0, 0, 0, 1, 1, 2], [0], [0]>} : vector<16x8x8xbf16>, vector<16x8x4xbf16>, vector<16x8x4xf32> -> vector<16x8x4xf32>
    "tpu.trace_stop"() : () -> ()
    %90 = vector.shape_cast %89 : vector<16x8x4xf32> to vector<8x2x8x4xf32>
    %91 = vector.extract_strided_slice %90 {offsets = [0, 0, 0, 0], sizes = [1, 2, 8, 4], strides = [1, 1, 1, 1]} : vector<8x2x8x4xf32> to vector<1x2x8x4xf32>
    %92 = vector.shape_cast %91 : vector<1x2x8x4xf32> to vector<2x8x4xf32>
    %93 = vector.extract_strided_slice %90 {offsets = [1, 0, 0, 0], sizes = [1, 2, 8, 4], strides = [1, 1, 1, 1]} : vector<8x2x8x4xf32> to vector<1x2x8x4xf32>
    %94 = vector.shape_cast %93 : vector<1x2x8x4xf32> to vector<2x8x4xf32>
    %95 = vector.extract_strided_slice %90 {offsets = [2, 0, 0, 0], sizes = [1, 2, 8, 4], strides = [1, 1, 1, 1]} : vector<8x2x8x4xf32> to vector<1x2x8x4xf32>
    %96 = vector.shape_cast %95 : vector<1x2x8x4xf32> to vector<2x8x4xf32>
    %97 = vector.extract_strided_slice %90 {offsets = [3, 0, 0, 0], sizes = [1, 2, 8, 4], strides = [1, 1, 1, 1]} : vector<8x2x8x4xf32> to vector<1x2x8x4xf32>
    %98 = vector.shape_cast %97 : vector<1x2x8x4xf32> to vector<2x8x4xf32>
    %99 = vector.extract_strided_slice %90 {offsets = [4, 0, 0, 0], sizes = [1, 2, 8, 4], strides = [1, 1, 1, 1]} : vector<8x2x8x4xf32> to vector<1x2x8x4xf32>
    %100 = vector.shape_cast %99 : vector<1x2x8x4xf32> to vector<2x8x4xf32>
    %101 = vector.extract_strided_slice %90 {offsets = [5, 0, 0, 0], sizes = [1, 2, 8, 4], strides = [1, 1, 1, 1]} : vector<8x2x8x4xf32> to vector<1x2x8x4xf32>
    %102 = vector.shape_cast %101 : vector<1x2x8x4xf32> to vector<2x8x4xf32>
    %103 = vector.extract_strided_slice %90 {offsets = [6, 0, 0, 0], sizes = [1, 2, 8, 4], strides = [1, 1, 1, 1]} : vector<8x2x8x4xf32> to vector<1x2x8x4xf32>
    %104 = vector.shape_cast %103 : vector<1x2x8x4xf32> to vector<2x8x4xf32>
    %105 = vector.extract_strided_slice %90 {offsets = [7, 0, 0, 0], sizes = [1, 2, 8, 4], strides = [1, 1, 1, 1]} : vector<8x2x8x4xf32> to vector<1x2x8x4xf32>
    %106 = vector.shape_cast %105 : vector<1x2x8x4xf32> to vector<2x8x4xf32>
    %107 = tpu.concatenate %92, %94, %96, %98, %100, %102, %104, %106 in 2 : vector<2x8x4xf32>, vector<2x8x4xf32>, vector<2x8x4xf32>, vector<2x8x4xf32>, vector<2x8x4xf32>, vector<2x8x4xf32>, vector<2x8x4xf32>, vector<2x8x4xf32> -> vector<2x8x32xf32>
    %108 = vector.shape_cast %107 : vector<2x8x32xf32> to vector<16x32xf32>
    %109 = arith.truncf %108 : vector<16x32xf32> to vector<16x32xbf16>
    %c0_13 = arith.constant 0 : index
    %c96 = arith.constant 96 : index
    %110 = vector.load %arg3[%c0_13, %c96] : memref<32x192xbf16, #tpu.memory_space<vmem>>, vector<32x32xbf16>
    %cst_14 = arith.constant dense<0.000000e+00> : vector<16x32xf32>
    %111 = tpu.matmul %109, %110, %cst_14 {dimension_numbers = #tpu.dot_dimension_numbers<[1], [0], [0], [1], [0, 0, 1, 1], [], []>} : vector<16x32xbf16>, vector<32x32xbf16>, vector<16x32xf32> -> vector<16x32xf32>
    %112 = vector.extract_strided_slice %4 {offsets = [2, 0], sizes = [1, 32], strides = [1, 1]} : vector<5x32xf32> to vector<1x32xf32>
    %113 = vector.broadcast %112 : vector<1x32xf32> to vector<16x32xf32>
    %114 = arith.addf %111, %113 : vector<16x32xf32>
    %115 = arith.truncf %114 : vector<16x32xf32> to vector<16x32xbf16>
    %c0_15 = arith.constant 0 : index
    %c128 = arith.constant 128 : index
    %116 = vector.load %arg3[%c0_15, %c128] : memref<32x192xbf16, #tpu.memory_space<vmem>>, vector<32x32xbf16>
    %cst_16 = arith.constant dense<0.000000e+00> : vector<16x32xf32>
    %117 = tpu.matmul %115, %116, %cst_16 {dimension_numbers = #tpu.dot_dimension_numbers<[1], [0], [0], [1], [0, 0, 1, 1], [], []>} : vector<16x32xbf16>, vector<32x32xbf16>, vector<16x32xf32> -> vector<16x32xf32>
    %118 = vector.extract_strided_slice %4 {offsets = [3, 0], sizes = [1, 32], strides = [1, 1]} : vector<5x32xf32> to vector<1x32xf32>
    %119 = vector.broadcast %118 : vector<1x32xf32> to vector<16x32xf32>
    %120 = arith.addf %117, %119 : vector<16x32xf32>
    %cst_17 = arith.constant 0.000000e+00 : f32
    %121 = vector.broadcast %cst_17 : f32 to vector<16x32xf32>
    %122 = arith.maximumf %120, %121 : vector<16x32xf32>
    %123 = arith.truncf %122 : vector<16x32xf32> to vector<16x32xbf16>
    %c0_18 = arith.constant 0 : index
    %c160 = arith.constant 160 : index
    %124 = vector.load %arg3[%c0_18, %c160] : memref<32x192xbf16, #tpu.memory_space<vmem>>, vector<32x32xbf16>
    %cst_19 = arith.constant dense<0.000000e+00> : vector<16x32xf32>
    %125 = tpu.matmul %123, %124, %cst_19 {dimension_numbers = #tpu.dot_dimension_numbers<[1], [0], [0], [1], [0, 0, 1, 1], [], []>} : vector<16x32xbf16>, vector<32x32xbf16>, vector<16x32xf32> -> vector<16x32xf32>
    %126 = vector.extract_strided_slice %4 {offsets = [4, 0], sizes = [1, 32], strides = [1, 1]} : vector<5x32xf32> to vector<1x32xf32>
    %127 = vector.broadcast %126 : vector<1x32xf32> to vector<16x32xf32>
    %128 = arith.addf %125, %127 : vector<16x32xf32>
    %cst_20 = arith.constant 0.000000e+00 : f32
    %129 = vector.broadcast %cst_20 : f32 to vector<16x32xf32>
    %130 = arith.subf %129, %128 : vector<16x32xf32>
    %131 = math.exp %130 : vector<16x32xf32>
    %cst_21 = arith.constant 1.000000e+00 : f32
    %132 = vector.broadcast %cst_21 : f32 to vector<16x32xf32>
    %133 = arith.addf %132, %131 : vector<16x32xf32>
    %134 = tpu.reciprocal %133 {approx = true} : vector<16x32xf32> -> vector<16x32xf32>
    %cst_22 = arith.constant 1.000000e+00 : f32
    %135 = vector.broadcast %cst_22 : f32 to vector<16x32xf32>
    %136 = arith.addf %135, %134 : vector<16x32xf32>
    %137 = arith.mulf %0, %136 : vector<16x32xf32>
    %c0_23 = arith.constant 0 : index
    %c0_24 = arith.constant 0 : index
    %138 = vector.load %arg5[%c0_23, %c0_24] : memref<16x32xf32, #tpu.memory_space<vmem>>, vector<16x32xf32>
    tpu.vector_store %arg5[%c0_23, %c0_24], %137 {strides = array<i32>} : memref<16x32xf32, #tpu.memory_space<vmem>>, vector<16x32xf32>,
    return
  }
  func.func @transform_0(%arg0: i32) -> (i32, i32) {
    %c0_i32 = arith.constant 0 : i32
    %c0_i32_0 = arith.constant 0 : i32
    %c0_i32_1 = arith.constant 0 : i32
    return %c0_i32, %c0_i32_0 : i32, i32
  }
  func.func @transform_1(%arg0: i32) -> (i32, i32) {
    %c0_i32 = arith.constant 0 : i32
    %c0_i32_0 = arith.constant 0 : i32
    %c0_i32_1 = arith.constant 0 : i32
    return %c0_i32, %c0_i32_0 : i32, i32
  }
  func.func @transform_2(%arg0: i32) -> (i32, i32) {
    %c0_i32 = arith.constant 0 : i32
    %c0_i32_0 = arith.constant 0 : i32
    %c0_i32_1 = arith.constant 0 : i32
    return %c0_i32, %c0_i32_0 : i32, i32
  }
  func.func @transform_3(%arg0: i32) -> (i32, i32) {
    %c0_i32 = arith.constant 0 : i32
    %c0_i32_0 = arith.constant 0 : i32
    %c0_i32_1 = arith.constant 0 : i32
    return %c0_i32, %c0_i32_0 : i32, i32
  }
  func.func @transform_4(%arg0: i32) -> (i32, i32) {
    %c0_i32 = arith.constant 0 : i32
    %c0_i32_0 = arith.constant 0 : i32
    %c0_i32_1 = arith.constant 0 : i32
    return %c0_i32, %c0_i32_0 : i32, i32
  }
}

</mosaic_0001>

<llo_original>
// kernel: tpu_custom_call.1
$region0: #{tpu_custom_call.1}
  #allocation0 [shape = 'u32[]', space=smem, size = 0x4, offset = 0x4, fixed_abs, tag = 'smem constant byte address 0x4 - core index']
  #allocation1 [shape = 'u32[144,128]{1,0:T(1,128)}', space=vmem, size = 0x12000, scoped, tag = 'internal scratch']
  %s0 = inlined_call_operand.hbm [shape: f32[16,32], index: 0, kind: input, shape index: {}]
  %s1 = inlined_call_operand.hbm [shape: f32[16,32], index: 1, kind: input, shape index: {}]
  %s2 = inlined_call_operand.hbm [shape: bf16[32,192], index: 2, kind: input, shape index: {}]
  %s3 = inlined_call_operand.vmem [shape: f32[5,32], index: 3, kind: input, shape index: {}]
  %s4 = inlined_call_operand.hbm [shape: f32[16,32], index: 4, kind: output, shape index: {}]
  %s5 = sld [smem:[#allocation0]]
  $region38: #{tpu_custom_call.1} parent=0
    _
  %s7 = ssub.s32 1, %s5
  %s8 = scalar_select 0, %s7, %s5
  $region1: #{tpu_custom_call.1} parent=0
    #allocation2 [shape = 'u8[8192]{0}', space=vmem, size = 0x2000, scoped, tag = 'input window, operand 0, single buffered']
    #allocation3 [shape = 's32[1]{0}', space=sflag, size = 0x4, scoped, tag = 'scoped memory for tpu_custom_call.1']
    #allocation4 [shape = 's32[1]{0}', space=sflag, size = 0x4, scoped, tag = 'scoped memory for tpu_custom_call.1']
    #allocation5 [shape = 'u8[8192]{0}', space=vmem, size = 0x2000, scoped, tag = 'input window, operand 1, single buffered']
    #allocation6 [shape = 's32[1]{0}', space=sflag, size = 0x4, scoped, tag = 'scoped memory for tpu_custom_call.1']
    #allocation7 [shape = 'u8[16384]{0}', space=vmem, size = 0x4000, scoped, tag = 'input window, operand 2, single buffered']
    #allocation8 [shape = 'u8[8192]{0}', space=vmem, size = 0x2000, scoped, tag = 'output window, operand 0, single buffered']
    %9 = vsyncpa [#allocation3], 0
    %10 = vsyncpa [#allocation6], 0
    %11 = vsyncpa [#allocation4], 0
    // Predicated region
    $region2: #{tpu_custom_call.1} parent=1 // pred_check
      _
    $region3: #{tpu_custom_call.1} parent=1 // pred_check_branch
      %13 = sbr.rel (0) target = $region5
    $region4: #{tpu_custom_call.1} parent=1 // pred_region
      %s15 = ssub.s32 256, 256
      %16 = vsyncadd [#allocation3], %s15
      %s17 = sshll.u32 [#allocation2], 4
      %s18 = int_to_ptr.vmem [resolvable:$true] %s17
      %23 = dma.hbm_to_vmem [thread:$0]  %s0, 256, %s18, [#allocation3], 128, 128, 8
    $region5: #{tpu_custom_call.1} parent=1 // pred_fallthru
      _
    // Predicated region
    $region6: #{tpu_custom_call.1} parent=1 // pred_check
      _
    $region7: #{tpu_custom_call.1} parent=1 // pred_check_branch
      %25 = sbr.rel (0) target = $region9
    $region8: #{tpu_custom_call.1} parent=1 // pred_region
      %s27 = ssub.s32 256, 256
      %28 = vsyncadd [#allocation6], %s27
      %s29 = sshll.u32 [#allocation5], 4
      %s30 = int_to_ptr.vmem [resolvable:$true] %s29
      %35 = dma.hbm_to_vmem [thread:$0]  %s1, 256, %s30, [#allocation6], 128, 128, 8
    $region9: #{tpu_custom_call.1} parent=1 // pred_fallthru
      _
    // Predicated region
    $region10: #{tpu_custom_call.1} parent=1 // pred_check
      _
    $region11: #{tpu_custom_call.1} parent=1 // pred_check_branch
      %37 = sbr.rel (0) target = $region13
    $region12: #{tpu_custom_call.1} parent=1 // pred_region
      %s39 = ssub.s32 512, 512
      %40 = vsyncadd [#allocation6], %s39
      %s41 = sshll.u32 [#allocation7], 4
      %s42 = int_to_ptr.vmem [resolvable:$true] %s41
      %47 = dma.hbm_to_vmem [thread:$0]  %s2, 512, %s42, [#allocation6], 128, 128, 8
    $region13: #{tpu_custom_call.1} parent=1 // pred_fallthru
      _
    // Predicated region
    $region14: #{tpu_custom_call.1} parent=1 // pred_check
      _
    $region15: #{tpu_custom_call.1} parent=1 // pred_check_branch
      %49 = sbr.rel (0) target = $region17
    $region16: #{tpu_custom_call.1} parent=1 // pred_region
      _
    $region17: #{tpu_custom_call.1} parent=1 // pred_fallthru
      _
    // Predicated region
    $region18: #{tpu_custom_call.1} parent=1 // pred_check
      _
    $region19: #{tpu_custom_call.1} parent=1 // pred_check_branch
      %51 = sbr.rel (0) target = $region21
    $region20: #{tpu_custom_call.1} parent=1 // pred_region
      %52 = dma.done [#allocation3], 256
    $region21: #{tpu_custom_call.1} parent=1 // pred_fallthru
      _
    // Predicated region
    $region22: #{tpu_custom_call.1} parent=1 // pred_check
      _
    $region23: #{tpu_custom_call.1} parent=1 // pred_check_branch
      %54 = sbr.rel (0) target = $region25
    $region24: #{tpu_custom_call.1} parent=1 // pred_region
      %55 = dma.done [#allocation6], 256
    $region25: #{tpu_custom_call.1} parent=1 // pred_fallthru
      _
    // Predicated region
    $region26: #{tpu_custom_call.1} parent=1 // pred_check
      _
    $region27: #{tpu_custom_call.1} parent=1 // pred_check_branch
      %57 = sbr.rel (0) target = $region29
    $region28: #{tpu_custom_call.1} parent=1 // pred_region
      %58 = dma.done [#allocation6], 512
    $region29: #{tpu_custom_call.1} parent=1 // pred_fallthru
      _
    %v60 = vld [vmem:[#allocation2] sm:$0xff]
    %v61 = vld [vmem:[#allocation2 + $0x8] sm:$0xff]
    %v62 = vpack.c.bf16 %v61, %v60
    %v63 = vld [vmem:[#allocation5] sm:$0xff]
    %v64 = vld [vmem:[#allocation5 + $0x8] sm:$0xff]
    %v65 = vpack.c.bf16 %v64, %v63
    %v66 = vld [vmem:[%s3] sm:$0x1f]
    %v67 = vld [vmem:[#allocation7] sm:$0xf]
    %v68 = vld [vmem:[#allocation7 + $0x8] sm:$0xf]
    %v69 = vld [vmem:[#allocation7 + $0x10] sm:$0xf]
    %v70 = vld [vmem:[#allocation7 + $0x18] sm:$0xf]
    %v71 = vlaneseq
    %v72 = vshrl.u32 %v71, 7
    %v73 = vsub.s32 0, %v72
    %v74 = vrot.slane %v66, %v73
    %v79 = vunpack.c.l.b16 %v67
    %v80 = vunpack.c.l.b16 %v68
    %v81 = vunpack.c.l.b16 %v69
    %v82 = vunpack.c.l.b16 %v70
    %v83 = vpack.c.b16 %v80, %v79
    %v84 = vpack.c.b16 %v82, %v81
    %vm87 = vcmask 261120
    %v89 = vsel %vm87, %v62, 0
    %91 = vmatprep.subr.bf16.mxu0 0
    %92 = vmatpush1.bf16.msra.mxu0 %v83
    %93 = vmatprep.subr.bf16.mxu0 0
    %94 = vmatpush1.bf16.msra.mxu0 %v84
    %95 = vmatprep.subr.bf16.mxu0 0
    %96 = vmatpush1.bf16.msra.mxu0 0
    %97 = vmatprep.subr.bf16.mxu0 0
    %98 = vmatpush1.bf16.msra.mxu0 0
    %99 = vmatprep.subr.bf16.mxu0 0
    %100 = vmatpush1.bf16.msra.mxu0 0
    %101 = vmatprep.subr.bf16.mxu0 0
    %102 = vmatpush1.bf16.msra.mxu0 0
    %103 = vmatprep.subr.bf16.mxu0 0
    %104 = vmatpush1.bf16.msra.mxu0 0
    %105 = vmatprep.subr.bf16.mxu0 0
    %106 = vmatpush1.bf16.msra.mxu0 0
    %107 = vmatprep.subr.bf16.mxu0 0
    %108 = vmatpush1.bf16.msra.mxu0 0
    %109 = vmatprep.subr.bf16.mxu0 0
    %110 = vmatpush1.bf16.msra.mxu0 0
    %111 = vmatprep.subr.bf16.mxu0 0
    %112 = vmatpush1.bf16.msra.mxu0 0
    %113 = vmatprep.subr.bf16.mxu0 0
    %114 = vmatpush1.bf16.msra.mxu0 0
    %115 = vmatprep.subr.bf16.mxu0 0
    %116 = vmatpush1.bf16.msra.mxu0 0
    %117 = vmatprep.subr.bf16.mxu0 0
    %118 = vmatpush1.bf16.msra.mxu0 0
    %119 = vmatprep.subr.bf16.mxu0 0
    %120 = vmatpush1.bf16.msra.mxu0 0
    %121 = vmatprep.subr.bf16.mxu0 0
    %122 = vmatpush1.bf16.msra.mxu0 0
    %123 = vmatprep.mubr.bf16.mxu0 0
    %124 = vmatmul.mubr.bf16.gmra.mrb[0].mxu0 %v89
    %v125 = vpop.f32.mrb[0].mxu0
    %v126 = vadd.f32 %v74, %v125
    %v127 = vpop.f32.mrb[0].mxu0
    %v128 = vpop.f32.mrb[0].mxu0
    %v129 = vadd.f32 %v74, %v128
    %v130 = vpop.f32.mrb[0].mxu0
    %131 = vdwg.mxu0
    %132 = vrot.lane.b32.xlu0 %v83, 96
    %v133 = vpop.permute.xlu0 %132
    %134 = vrot.lane.b32.xlu0 %v84, 96
    %v135 = vpop.permute.xlu0 %134
    %v139 = vsel %vm87, %v65, 0
    %141 = vmatprep.subr.bf16.mxu0 0
    %142 = vmatpush1.bf16.msra.mxu0 %v133
    %143 = vmatprep.subr.bf16.mxu0 0
    %144 = vmatpush1.bf16.msra.mxu0 %v135
    %145 = vmatprep.subr.bf16.mxu0 0
    %146 = vmatpush1.bf16.msra.mxu0 0
    %147 = vmatprep.subr.bf16.mxu0 0
    %148 = vmatpush1.bf16.msra.mxu0 0
    %149 = vmatprep.subr.bf16.mxu0 0
    %150 = vmatpush1.bf16.msra.mxu0 0
    %151 = vmatprep.subr.bf16.mxu0 0
    %152 = vmatpush1.bf16.msra.mxu0 0
    %153 = vmatprep.subr.bf16.mxu0 0
    %154 = vmatpush1.bf16.msra.mxu0 0
    %155 = vmatprep.subr.bf16.mxu0 0
    %156 = vmatpush1.bf16.msra.mxu0 0
    %157 = vmatprep.subr.bf16.mxu0 0
    %158 = vmatpush1.bf16.msra.mxu0 0
    %159 = vmatprep.subr.bf16.mxu0 0
    %160 = vmatpush1.bf16.msra.mxu0 0
    %161 = vmatprep.subr.bf16.mxu0 0
    %162 = vmatpush1.bf16.msra.mxu0 0
    %163 = vmatprep.subr.bf16.mxu0 0
    %164 = vmatpush1.bf16.msra.mxu0 0
    %165 = vmatprep.subr.bf16.mxu0 0
    %166 = vmatpush1.bf16.msra.mxu0 0
    %167 = vmatprep.subr.bf16.mxu0 0
    %168 = vmatpush1.bf16.msra.mxu0 0
    %169 = vmatprep.subr.bf16.mxu0 0
    %170 = vmatpush1.bf16.msra.mxu0 0
    %171 = vmatprep.subr.bf16.mxu0 0
    %172 = vmatpush1.bf16.msra.mxu0 0
    %173 = vmatprep.mubr.bf16.mxu0 0
    %174 = vmatmul.mubr.bf16.gmra.mrb[0].mxu0 %v139
    %v175 = vpop.f32.mrb[0].mxu0
    %v176 = vadd.f32 0.0, %v175
    %v177 = vpop.f32.mrb[0].mxu0
    %v178 = vpop.f32.mrb[0].mxu0
    %v179 = vadd.f32 0.0, %v178
    %v180 = vpop.f32.mrb[0].mxu0
    %181 = vdwg.mxu0
    %v182 = vlaneseq
    %v183 = vshrl.u32 %v182, 7
    %v184 = vsub.s32 1, %v183
    %v185 = vrot.slane %v66, %v184
    %v186 = vadd.f32 %v176, %v185
    %v187 = vadd.f32 %v179, %v185
    %190 = vrot.lane.b32.xlu0 %v126, 124
    %v191 = vpop.permute.xlu0 %190
    %192 = vrot.lane.b32.xlu0 %v129, 124
    %v193 = vpop.permute.xlu0 %192
    %196 = vrot.lane.b32.xlu0 %v126, 120
    %v197 = vpop.permute.xlu0 %196
    %198 = vrot.lane.b32.xlu0 %v129, 120
    %v199 = vpop.permute.xlu0 %198
    %202 = vrot.lane.b32.xlu0 %v126, 116
    %v203 = vpop.permute.xlu0 %202
    %204 = vrot.lane.b32.xlu0 %v129, 116
    %v205 = vpop.permute.xlu0 %204
    %208 = vrot.lane.b32.xlu0 %v126, 112
    %v209 = vpop.permute.xlu0 %208
    %210 = vrot.lane.b32.xlu0 %v129, 112
    %v211 = vpop.permute.xlu0 %210
    %214 = vrot.lane.b32.xlu0 %v126, 108
    %v215 = vpop.permute.xlu0 %214
    %216 = vrot.lane.b32.xlu0 %v129, 108
    %v217 = vpop.permute.xlu0 %216
    %220 = vrot.lane.b32.xlu0 %v126, 104
    %v221 = vpop.permute.xlu0 %220
    %222 = vrot.lane.b32.xlu0 %v129, 104
    %v223 = vpop.permute.xlu0 %222
    %226 = vrot.lane.b32.xlu0 %v126, 100
    %v227 = vpop.permute.xlu0 %226
    %228 = vrot.lane.b32.xlu0 %v129, 100
    %v229 = vpop.permute.xlu0 %228
    %v232 = vpack.c.bf16 %v126, %v126
    %v233 = vpack.c.bf16 %v129, %v129
    %v234 = vpack.c.bf16 %v191, %v191
    %v235 = vpack.c.bf16 %v193, %v193
    %v236 = vpack.c.bf16 %v197, %v197
    %v237 = vpack.c.bf16 %v199, %v199
    %v238 = vpack.c.bf16 %v203, %v203
    %v239 = vpack.c.bf16 %v205, %v205
    %v240 = vpack.c.bf16 %v209, %v209
    %v241 = vpack.c.bf16 %v211, %v211
    %v242 = vpack.c.bf16 %v215, %v215
    %v243 = vpack.c.bf16 %v217, %v217
    %v244 = vpack.c.bf16 %v221, %v221
    %v245 = vpack.c.bf16 %v223, %v223
    %v246 = vpack.c.bf16 %v227, %v227
    %v247 = vpack.c.bf16 %v229, %v229
    %250 = vrot.lane.b32.xlu0 %v186, 124
    %v251 = vpop.permute.xlu0 %250
    %252 = vrot.lane.b32.xlu0 %v187, 124
    %v253 = vpop.permute.xlu0 %252
    %256 = vrot.lane.b32.xlu0 %v186, 120
    %v257 = vpop.permute.xlu0 %256
    %258 = vrot.lane.b32.xlu0 %v187, 120
    %v259 = vpop.permute.xlu0 %258
    %262 = vrot.lane.b32.xlu0 %v186, 116
    %v263 = vpop.permute.xlu0 %262
    %264 = vrot.lane.b32.xlu0 %v187, 116
    %v265 = vpop.permute.xlu0 %264
    %268 = vrot.lane.b32.xlu0 %v186, 112
    %v269 = vpop.permute.xlu0 %268
    %270 = vrot.lane.b32.xlu0 %v187, 112
    %v271 = vpop.permute.xlu0 %270
    %274 = vrot.lane.b32.xlu0 %v186, 108
    %v275 = vpop.permute.xlu0 %274
    %276 = vrot.lane.b32.xlu0 %v187, 108
    %v277 = vpop.permute.xlu0 %276
    %280 = vrot.lane.b32.xlu0 %v186, 104
    %v281 = vpop.permute.xlu0 %280
    %282 = vrot.lane.b32.xlu0 %v187, 104
    %v283 = vpop.permute.xlu0 %282
    %286 = vrot.lane.b32.xlu0 %v186, 100
    %v287 = vpop.permute.xlu0 %286
    %288 = vrot.lane.b32.xlu0 %v187, 100
    %v289 = vpop.permute.xlu0 %288
    %v292 = vpack.c.bf16 %v186, %v186
    %v293 = vpack.c.bf16 %v187, %v187
    %v294 = vpack.c.bf16 %v251, %v251
    %v295 = vpack.c.bf16 %v253, %v253
    %v296 = vpack.c.bf16 %v257, %v257
    %v297 = vpack.c.bf16 %v259, %v259
    %v298 = vpack.c.bf16 %v263, %v263
    %v299 = vpack.c.bf16 %v265, %v265
    %v300 = vpack.c.bf16 %v269, %v269
    %v301 = vpack.c.bf16 %v271, %v271
    %v302 = vpack.c.bf16 %v275, %v275
    %v303 = vpack.c.bf16 %v277, %v277
    %v304 = vpack.c.bf16 %v281, %v281
    %v305 = vpack.c.bf16 %v283, %v283
    %v306 = vpack.c.bf16 %v287, %v287
    %v307 = vpack.c.bf16 %v289, %v289
    %310 = vrot.lane.b32.xlu0 %v176, 124
    %v311 = vpop.permute.xlu0 %310
    %312 = vrot.lane.b32.xlu0 %v179, 124
    %v313 = vpop.permute.xlu0 %312
    %316 = vrot.lane.b32.xlu0 %v176, 120
    %v317 = vpop.permute.xlu0 %316
    %318 = vrot.lane.b32.xlu0 %v179, 120
    %v319 = vpop.permute.xlu0 %318
    %322 = vrot.lane.b32.xlu0 %v176, 116
    %v323 = vpop.permute.xlu0 %322
    %324 = vrot.lane.b32.xlu0 %v179, 116
    %v325 = vpop.permute.xlu0 %324
    %328 = vrot.lane.b32.xlu0 %v176, 112
    %v329 = vpop.permute.xlu0 %328
    %330 = vrot.lane.b32.xlu0 %v179, 112
    %v331 = vpop.permute.xlu0 %330
    %334 = vrot.lane.b32.xlu0 %v176, 108
    %v335 = vpop.permute.xlu0 %334
    %336 = vrot.lane.b32.xlu0 %v179, 108
    %v337 = vpop.permute.xlu0 %336
    %340 = vrot.lane.b32.xlu0 %v176, 104
    %v341 = vpop.permute.xlu0 %340
    %342 = vrot.lane.b32.xlu0 %v179, 104
    %v343 = vpop.permute.xlu0 %342
    %346 = vrot.lane.b32.xlu0 %v176, 100
    %v347 = vpop.permute.xlu0 %346
    %348 = vrot.lane.b32.xlu0 %v179, 100
    %v349 = vpop.permute.xlu0 %348
    %v352 = vpack.c.bf16 %v176, %v176
    %v353 = vpack.c.bf16 %v179, %v179
    %v354 = vpack.c.bf16 %v311, %v311
    %v355 = vpack.c.bf16 %v313, %v313
    %v356 = vpack.c.bf16 %v317, %v317
    %v357 = vpack.c.bf16 %v319, %v319
    %v358 = vpack.c.bf16 %v323, %v323
    %v359 = vpack.c.bf16 %v325, %v325
    %v360 = vpack.c.bf16 %v329, %v329
    %v361 = vpack.c.bf16 %v331, %v331
    %v362 = vpack.c.bf16 %v335, %v335
    %v363 = vpack.c.bf16 %v337, %v337
    %v364 = vpack.c.bf16 %v341, %v341
    %v365 = vpack.c.bf16 %v343, %v343
    %v366 = vpack.c.bf16 %v347, %v347
    %v367 = vpack.c.bf16 %v349, %v349
    %vm368 = vcmask 31744
    %v370 = vsel %vm368, %v232, 0
    %v373 = vsel %vm368, %v292, 0
    %375 = vmatprep.subr.bf16.mxu0 0
    %376 = vmatpush1.bf16.xpose.msra.mxu0 %v373
    %377 = vmatprep.subr.bf16.mxu0 0
    %378 = vmatpush1.bf16.xpose.msra.mxu0 0
    %379 = vmatprep.subr.bf16.mxu0 0
    %380 = vmatpush1.bf16.xpose.msra.mxu0 0
    %381 = vmatprep.subr.bf16.mxu0 0
    %382 = vmatpush1.bf16.xpose.msra.mxu0 0
    %383 = vmatprep.subr.bf16.mxu0 0
    %384 = vmatpush1.bf16.xpose.msra.mxu0 0
    %385 = vmatprep.subr.bf16.mxu0 0
    %386 = vmatpush1.bf16.xpose.msra.mxu0 0
    %387 = vmatprep.subr.bf16.mxu0 0
    %388 = vmatpush1.bf16.xpose.msra.mxu0 0
    %389 = vmatprep.subr.bf16.mxu0 0
    %390 = vmatpush1.bf16.xpose.msra.mxu0 0
    %391 = vmatprep.subr.bf16.mxu0 0
    %392 = vmatpush1.bf16.xpose.msra.mxu0 0
    %393 = vmatprep.subr.bf16.mxu0 0
    %394 = vmatpush1.bf16.xpose.msra.mxu0 0
    %395 = vmatprep.subr.bf16.mxu0 0
    %396 = vmatpush1.bf16.xpose.msra.mxu0 0
    %397 = vmatprep.subr.bf16.mxu0 0
    %398 = vmatpush1.bf16.xpose.msra.mxu0 0
    %399 = vmatprep.subr.bf16.mxu0 0
    %400 = vmatpush1.bf16.xpose.msra.mxu0 0
    %401 = vmatprep.subr.bf16.mxu0 0
    %402 = vmatpush1.bf16.xpose.msra.mxu0 0
    %403 = vmatprep.subr.bf16.mxu0 0
    %404 = vmatpush1.bf16.xpose.msra.mxu0 0
    %405 = vmatprep.subr.bf16.mxu0 0
    %406 = vmatpush1.bf16.xpose.msra.mxu0 0
    %407 = vmatprep.mubr.bf16.mxu0 0
    %408 = vmatmul.mubr.bf16.gmra.mrb[0].mxu0 %v370
    %v409 = vpop.f32.mrb[0].mxu0
    %v410 = vadd.f32 0.0, %v409
    %v411 = vpop.f32.mrb[0].mxu0
    %v412 = vpop.f32.mrb[0].mxu0
    %v413 = vpop.f32.mrb[0].mxu0
    %414 = vdwg.mxu0
    %v416 = vsel %vm368, %v233, 0
    %v419 = vsel %vm368, %v293, 0
    %421 = vmatprep.subr.bf16.mxu0 0
    %422 = vmatpush1.bf16.xpose.msra.mxu0 %v419
    %423 = vmatprep.subr.bf16.mxu0 0
    %424 = vmatpush1.bf16.xpose.msra.mxu0 0
    %425 = vmatprep.subr.bf16.mxu0 0
    %426 = vmatpush1.bf16.xpose.msra.mxu0 0
    %427 = vmatprep.subr.bf16.mxu0 0
    %428 = vmatpush1.bf16.xpose.msra.mxu0 0
    %429 = vmatprep.subr.bf16.mxu0 0
    %430 = vmatpush1.bf16.xpose.msra.mxu0 0
    %431 = vmatprep.subr.bf16.mxu0 0
    %432 = vmatpush1.bf16.xpose.msra.mxu0 0
    %433 = vmatprep.subr.bf16.mxu0 0
    %434 = vmatpush1.bf16.xpose.msra.mxu0 0
    %435 = vmatprep.subr.bf16.mxu0 0
    %436 = vmatpush1.bf16.xpose.msra.mxu0 0
    %437 = vmatprep.subr.bf16.mxu0 0
    %438 = vmatpush1.bf16.xpose.msra.mxu0 0
    %439 = vmatprep.subr.bf16.mxu0 0
    %440 = vmatpush1.bf16.xpose.msra.mxu0 0
    %441 = vmatprep.subr.bf16.mxu0 0
    %442 = vmatpush1.bf16.xpose.msra.mxu0 0
    %443 = vmatprep.subr.bf16.mxu0 0
    %444 = vmatpush1.bf16.xpose.msra.mxu0 0
    %445 = vmatprep.subr.bf16.mxu0 0
    %446 = vmatpush1.bf16.xpose.msra.mxu0 0
    %447 = vmatprep.subr.bf16.mxu0 0
    %448 = vmatpush1.bf16.xpose.msra.mxu0 0
    %449 = vmatprep.subr.bf16.mxu0 0
    %450 = vmatpush1.bf16.xpose.msra.mxu0 0
    %451 = vmatprep.subr.bf16.mxu0 0
    %452 = vmatpush1.bf16.xpose.msra.mxu0 0
    %453 = vmatprep.mubr.bf16.mxu0 0
    %454 = vmatmul.mubr.bf16.gmra.mrb[0].mxu0 %v416
    %v455 = vpop.f32.mrb[0].mxu0
    %v456 = vadd.f32 0.0, %v455
    %v457 = vpop.f32.mrb[0].mxu0
    %v458 = vpop.f32.mrb[0].mxu0
    %v459 = vpop.f32.mrb[0].mxu0
    %460 = vdwg.mxu0
    %v462 = vsel %vm368, %v234, 0
    %v465 = vsel %vm368, %v294, 0
    %467 = vmatprep.subr.bf16.mxu0 0
    %468 = vmatpush1.bf16.xpose.msra.mxu0 %v465
    %469 = vmatprep.subr.bf16.mxu0 0
    %470 = vmatpush1.bf16.xpose.msra.mxu0 0
    %471 = vmatprep.subr.bf16.mxu0 0
    %472 = vmatpush1.bf16.xpose.msra.mxu0 0
    %473 = vmatprep.subr.bf16.mxu0 0
    %474 = vmatpush1.bf16.xpose.msra.mxu0 0
    %475 = vmatprep.subr.bf16.mxu0 0
    %476 = vmatpush1.bf16.xpose.msra.mxu0 0
    %477 = vmatprep.subr.bf16.mxu0 0
    %478 = vmatpush1.bf16.xpose.msra.mxu0 0
    %479 = vmatprep.subr.bf16.mxu0 0
    %480 = vmatpush1.bf16.xpose.msra.mxu0 0
    %481 = vmatprep.subr.bf16.mxu0 0
    %482 = vmatpush1.bf16.xpose.msra.mxu0 0
    %483 = vmatprep.subr.bf16.mxu0 0
    %484 = vmatpush1.bf16.xpose.msra.mxu0 0
    %485 = vmatprep.subr.bf16.mxu0 0
    %486 = vmatpush1.bf16.xpose.msra.mxu0 0
    %487 = vmatprep.subr.bf16.mxu0 0
    %488 = vmatpush1.bf16.xpose.msra.mxu0 0
    %489 = vmatprep.subr.bf16.mxu0 0
    %490 = vmatpush1.bf16.xpose.msra.mxu0 0
    %491 = vmatprep.subr.bf16.mxu0 0
    %492 = vmatpush1.bf16.xpose.msra.mxu0 0
    %493 = vmatprep.subr.bf16.mxu0 0
    %494 = vmatpush1.bf16.xpose.msra.mxu0 0
    %495 = vmatprep.subr.bf16.mxu0 0
    %496 = vmatpush1.bf16.xpose.msra.mxu0 0
    %497 = vmatprep.subr.bf16.mxu0 0
    %498 = vmatpush1.bf16.xpose.msra.mxu0 0
    %499 = vmatprep.mubr.bf16.mxu0 0
    %500 = vmatmul.mubr.bf16.gmra.mrb[0].mxu0 %v462
    %v501 = vpop.f32.mrb[0].mxu0
    %v502 = vadd.f32 0.0, %v501
    %v503 = vpop.f32.mrb[0].mxu0
    %v504 = vpop.f32.mrb[0].mxu0
    %v505 = vpop.f32.mrb[0].mxu0
    %506 = vdwg.mxu0
    %v508 = vsel %vm368, %v235, 0
    %v511 = vsel %vm368, %v295, 0
    %513 = vmatprep.subr.bf16.mxu0 0
    %514 = vmatpush1.bf16.xpose.msra.mxu0 %v511
    %515 = vmatprep.subr.bf16.mxu0 0
    %516 = vmatpush1.bf16.xpose.msra.mxu0 0
    %517 = vmatprep.subr.bf16.mxu0 0
    %518 = vmatpush1.bf16.xpose.msra.mxu0 0
    %519 = vmatprep.subr.bf16.mxu0 0
    %520 = vmatpush1.bf16.xpose.msra.mxu0 0
    %521 = vmatprep.subr.bf16.mxu0 0
    %522 = vmatpush1.bf16.xpose.msra.mxu0 0
    %523 = vmatprep.subr.bf16.mxu0 0
    %524 = vmatpush1.bf16.xpose.msra.mxu0 0
    %525 = vmatprep.subr.bf16.mxu0 0
    %526 = vmatpush1.bf16.xpose.msra.mxu0 0
    %527 = vmatprep.subr.bf16.mxu0 0
    %528 = vmatpush1.bf16.xpose.msra.mxu0 0
    %529 = vmatprep.subr.bf16.mxu0 0
    %530 = vmatpush1.bf16.xpose.msra.mxu0 0
    %531 = vmatprep.subr.bf16.mxu0 0
    %532 = vmatpush1.bf16.xpose.msra.mxu0 0
    %533 = vmatprep.subr.bf16.mxu0 0
    %534 = vmatpush1.bf16.xpose.msra.mxu0 0
    %535 = vmatprep.subr.bf16.mxu0 0
    %536 = vmatpush1.bf16.xpose.msra.mxu0 0
    %537 = vmatprep.subr.bf16.mxu0 0
    %538 = vmatpush1.bf16.xpose.msra.mxu0 0
    %539 = vmatprep.subr.bf16.mxu0 0
    %540 = vmatpush1.bf16.xpose.msra.mxu0 0
    %541 = vmatprep.subr.bf16.mxu0 0
    %542 = vmatpush1.bf16.xpose.msra.mxu0 0
    %543 = vmatprep.subr.bf16.mxu0 0
    %544 = vmatpush1.bf16.xpose.msra.mxu0 0
    %545 = vmatprep.mubr.bf16.mxu0 0
    %546 = vmatmul.mubr.bf16.gmra.mrb[0].mxu0 %v508
    %v547 = vpop.f32.mrb[0].mxu0
    %v548 = vadd.f32 0.0, %v547
    %v549 = vpop.f32.mrb[0].mxu0
    %v550 = vpop.f32.mrb[0].mxu0
    %v551 = vpop.f32.mrb[0].mxu0
    %552 = vdwg.mxu0
    %v554 = vsel %vm368, %v236, 0
    %v557 = vsel %vm368, %v296, 0
    %559 = vmatprep.subr.bf16.mxu0 0
    %560 = vmatpush1.bf16.xpose.msra.mxu0 %v557
    %561 = vmatprep.subr.bf16.mxu0 0
    %562 = vmatpush1.bf16.xpose.msra.mxu0 0
    %563 = vmatprep.subr.bf16.mxu0 0
    %564 = vmatpush1.bf16.xpose.msra.mxu0 0
    %565 = vmatprep.subr.bf16.mxu0 0
    %566 = vmatpush1.bf16.xpose.msra.mxu0 0
    %567 = vmatprep.subr.bf16.mxu0 0
    %568 = vmatpush1.bf16.xpose.msra.mxu0 0
    %569 = vmatprep.subr.bf16.mxu0 0
    %570 = vmatpush1.bf16.xpose.msra.mxu0 0
    %571 = vmatprep.subr.bf16.mxu0 0
    %572 = vmatpush1.bf16.xpose.msra.mxu0 0
    %573 = vmatprep.subr.bf16.mxu0 0
    %574 = vmatpush1.bf16.xpose.msra.mxu0 0
    %575 = vmatprep.subr.bf16.mxu0 0
    %576 = vmatpush1.bf16.xpose.msra.mxu0 0
    %577 = vmatprep.subr.bf16.mxu0 0
    %578 = vmatpush1.bf16.xpose.msra.mxu0 0
    %579 = vmatprep.subr.bf16.mxu0 0
    %580 = vmatpush1.bf16.xpose.msra.mxu0 0
    %581 = vmatprep.subr.bf16.mxu0 0
    %582 = vmatpush1.bf16.xpose.msra.mxu0 0
    %583 = vmatprep.subr.bf16.mxu0 0
    %584 = vmatpush1.bf16.xpose.msra.mxu0 0
    %585 = vmatprep.subr.bf16.mxu0 0
    %586 = vmatpush1.bf16.xpose.msra.mxu0 0
    %587 = vmatprep.subr.bf16.mxu0 0
    %588 = vmatpush1.bf16.xpose.msra.mxu0 0
    %589 = vmatprep.subr.bf16.mxu0 0
    %590 = vmatpush1.bf16.xpose.msra.mxu0 0
    %591 = vmatprep.mubr.bf16.mxu0 0
    %592 = vmatmul.mubr.bf16.gmra.mrb[0].mxu0 %v554
    %v593 = vpop.f32.mrb[0].mxu0
    %v594 = vadd.f32 0.0, %v593
    %v595 = vpop.f32.mrb[0].mxu0
    %v596 = vpop.f32.mrb[0].mxu0
    %v597 = vpop.f32.mrb[0].mxu0
    %598 = vdwg.mxu0
    %v600 = vsel %vm368, %v237, 0
    %v603 = vsel %vm368, %v297, 0
    %605 = vmatprep.subr.bf16.mxu0 0
    %606 = vmatpush1.bf16.xpose.msra.mxu0 %v603
    %607 = vmatprep.subr.bf16.mxu0 0
    %608 = vmatpush1.bf16.xpose.msra.mxu0 0
    %609 = vmatprep.subr.bf16.mxu0 0
    %610 = vmatpush1.bf16.xpose.msra.mxu0 0
    %611 = vmatprep.subr.bf16.mxu0 0
    %612 = vmatpush1.bf16.xpose.msra.mxu0 0
    %613 = vmatprep.subr.bf16.mxu0 0
    %614 = vmatpush1.bf16.xpose.msra.mxu0 0
    %615 = vmatprep.subr.bf16.mxu0 0
    %616 = vmatpush1.bf16.xpose.msra.mxu0 0
    %617 = vmatprep.subr.bf16.mxu0 0
    %618 = vmatpush1.bf16.xpose.msra.mxu0 0
    %619 = vmatprep.subr.bf16.mxu0 0
    %620 = vmatpush1.bf16.xpose.msra.mxu0 0
    %621 = vmatprep.subr.bf16.mxu0 0
    %622 = vmatpush1.bf16.xpose.msra.mxu0 0
    %623 = vmatprep.subr.bf16.mxu0 0
    %624 = vmatpush1.bf16.xpose.msra.mxu0 0
    %625 = vmatprep.subr.bf16.mxu0 0
    %626 = vmatpush1.bf16.xpose.msra.mxu0 0
    %627 = vmatprep.subr.bf16.mxu0 0
    %628 = vmatpush1.bf16.xpose.msra.mxu0 0
    %629 = vmatprep.subr.bf16.mxu0 0
    %630 = vmatpush1.bf16.xpose.msra.mxu0 0
    %631 = vmatprep.subr.bf16.mxu0 0
    %632 = vmatpush1.bf16.xpose.msra.mxu0 0
    %633 = vmatprep.subr.bf16.mxu0 0
    %634 = vmatpush1.bf16.xpose.msra.mxu0 0
    %635 = vmatprep.subr.bf16.mxu0 0
    %636 = vmatpush1.bf16.xpose.msra.mxu0 0
    %637 = vmatprep.mubr.bf16.mxu0 0
    %638 = vmatmul.mubr.bf16.gmra.mrb[0].mxu0 %v600
    %v639 = vpop.f32.mrb[0].mxu0
    %v640 = vadd.f32 0.0, %v639
    %v641 = vpop.f32.mrb[0].mxu0
    %v642 = vpop.f32.mrb[0].mxu0
    %v643 = vpop.f32.mrb[0].mxu0
    %644 = vdwg.mxu0
    %v646 = vsel %vm368, %v238, 0
    %v649 = vsel %vm368, %v298, 0
    %651 = vmatprep.subr.bf16.mxu0 0
    %652 = vmatpush1.bf16.xpose.msra.mxu0 %v649
    %653 = vmatprep.subr.bf16.mxu0 0
    %654 = vmatpush1.bf16.xpose.msra.mxu0 0
    %655 = vmatprep.subr.bf16.mxu0 0
    %656 = vmatpush1.bf16.xpose.msra.mxu0 0
    %657 = vmatprep.subr.bf16.mxu0 0
    %658 = vmatpush1.bf16.xpose.msra.mxu0 0
    %659 = vmatprep.subr.bf16.mxu0 0
    %660 = vmatpush1.bf16.xpose.msra.mxu0 0
    %661 = vmatprep.subr.bf16.mxu0 0
    %662 = vmatpush1.bf16.xpose.msra.mxu0 0
    %663 = vmatprep.subr.bf16.mxu0 0
    %664 = vmatpush1.bf16.xpose.msra.mxu0 0
    %665 = vmatprep.subr.bf16.mxu0 0
    %666 = vmatpush1.bf16.xpose.msra.mxu0 0
    %667 = vmatprep.subr.bf16.mxu0 0
    %668 = vmatpush1.bf16.xpose.msra.mxu0 0
    %669 = vmatprep.subr.bf16.mxu0 0
    %670 = vmatpush1.bf16.xpose.msra.mxu0 0
    %671 = vmatprep.subr.bf16.mxu0 0
    %672 = vmatpush1.bf16.xpose.msra.mxu0 0
    %673 = vmatprep.subr.bf16.mxu0 0
    %674 = vmatpush1.bf16.xpose.msra.mxu0 0
    %675 = vmatprep.subr.bf16.mxu0 0
    %676 = vmatpush1.bf16.xpose.msra.mxu0 0
    %677 = vmatprep.subr.bf16.mxu0 0
    %678 = vmatpush1.bf16.xpose.msra.mxu0 0
    %679 = vmatprep.subr.bf16.mxu0 0
    %680 = vmatpush1.bf16.xpose.msra.mxu0 0
    %681 = vmatprep.subr.bf16.mxu0 0
    %682 = vmatpush1.bf16.xpose.msra.mxu0 0
    %683 = vmatprep.mubr.bf16.mxu0 0
    %684 = vmatmul.mubr.bf16.gmra.mrb[0].mxu0 %v646
    %v685 = vpop.f32.mrb[0].mxu0
    %v686 = vadd.f32 0.0, %v685
    %v687 = vpop.f32.mrb[0].mxu0
    %v688 = vpop.f32.mrb[0].mxu0
    %v689 = vpop.f32.mrb[0].mxu0
    %690 = vdwg.mxu0
    %v692 = vsel %vm368, %v239, 0
    %v695 = vsel %vm368, %v299, 0
    %697 = vmatprep.subr.bf16.mxu0 0
    %698 = vmatpush1.bf16.xpose.msra.mxu0 %v695
    %699 = vmatprep.subr.bf16.mxu0 0
    %700 = vmatpush1.bf16.xpose.msra.mxu0 0
    %701 = vmatprep.subr.bf16.mxu0 0
    %702 = vmatpush1.bf16.xpose.msra.mxu0 0
    %703 = vmatprep.subr.bf16.mxu0 0
    %704 = vmatpush1.bf16.xpose.msra.mxu0 0
    %705 = vmatprep.subr.bf16.mxu0 0
    %706 = vmatpush1.bf16.xpose.msra.mxu0 0
    %707 = vmatprep.subr.bf16.mxu0 0
    %708 = vmatpush1.bf16.xpose.msra.mxu0 0
    %709 = vmatprep.subr.bf16.mxu0 0
    %710 = vmatpush1.bf16.xpose.msra.mxu0 0
    %711 = vmatprep.subr.bf16.mxu0 0
    %712 = vmatpush1.bf16.xpose.msra.mxu0 0
    %713 = vmatprep.subr.bf16.mxu0 0
    %714 = vmatpush1.bf16.xpose.msra.mxu0 0
    %715 = vmatprep.subr.bf16.mxu0 0
    %716 = vmatpush1.bf16.xpose.msra.mxu0 0
    %717 = vmatprep.subr.bf16.mxu0 0
    %718 = vmatpush1.bf16.xpose.msra.mxu0 0
    %719 = vmatprep.subr.bf16.mxu0 0
    %720 = vmatpush1.bf16.xpose.msra.mxu0 0
    %721 = vmatprep.subr.bf16.mxu0 0
    %722 = vmatpush1.bf16.xpose.msra.mxu0 0
    %723 = vmatprep.subr.bf16.mxu0 0
    %724 = vmatpush1.bf16.xpose.msra.mxu0 0
    %725 = vmatprep.subr.bf16.mxu0 0
    %726 = vmatpush1.bf16.xpose.msra.mxu0 0
    %727 = vmatprep.subr.bf16.mxu0 0
    %728 = vmatpush1.bf16.xpose.msra.mxu0 0
    %729 = vmatprep.mubr.bf16.mxu0 0
    %730 = vmatmul.mubr.bf16.gmra.mrb[0].mxu0 %v692
    %v731 = vpop.f32.mrb[0].mxu0
    %v732 = vadd.f32 0.0, %v731
    %v733 = vpop.f32.mrb[0].mxu0
    %v734 = vpop.f32.mrb[0].mxu0
    %v735 = vpop.f32.mrb[0].mxu0
    %736 = vdwg.mxu0
    %v738 = vsel %vm368, %v240, 0
    %v741 = vsel %vm368, %v300, 0
    %743 = vmatprep.subr.bf16.mxu0 0
    %744 = vmatpush1.bf16.xpose.msra.mxu0 %v741
    %745 = vmatprep.subr.bf16.mxu0 0
    %746 = vmatpush1.bf16.xpose.msra.mxu0 0
    %747 = vmatprep.subr.bf16.mxu0 0
    %748 = vmatpush1.bf16.xpose.msra.mxu0 0
    %749 = vmatprep.subr.bf16.mxu0 0
    %750 = vmatpush1.bf16.xpose.msra.mxu0 0
    %751 = vmatprep.subr.bf16.mxu0 0
    %752 = vmatpush1.bf16.xpose.msra.mxu0 0
    %753 = vmatprep.subr.bf16.mxu0 0
    %754 = vmatpush1.bf16.xpose.msra.mxu0 0
    %755 = vmatprep.subr.bf16.mxu0 0
    %756 = vmatpush1.bf16.xpose.msra.mxu0 0
    %757 = vmatprep.subr.bf16.mxu0 0
    %758 = vmatpush1.bf16.xpose.msra.mxu0 0
    %759 = vmatprep.subr.bf16.mxu0 0
    %760 = vmatpush1.bf16.xpose.msra.mxu0 0
    %761 = vmatprep.subr.bf16.mxu0 0
    %762 = vmatpush1.bf16.xpose.msra.mxu0 0
    %763 = vmatprep.subr.bf16.mxu0 0
    %764 = vmatpush1.bf16.xpose.msra.mxu0 0
    %765 = vmatprep.subr.bf16.mxu0 0
    %766 = vmatpush1.bf16.xpose.msra.mxu0 0
    %767 = vmatprep.subr.bf16.mxu0 0
    %768 = vmatpush1.bf16.xpose.msra.mxu0 0
    %769 = vmatprep.subr.bf16.mxu0 0
    %770 = vmatpush1.bf16.xpose.msra.mxu0 0
    %771 = vmatprep.subr.bf16.mxu0 0
    %772 = vmatpush1.bf16.xpose.msra.mxu0 0
    %773 = vmatprep.subr.bf16.mxu0 0
    %774 = vmatpush1.bf16.xpose.msra.mxu0 0
    %775 = vmatprep.mubr.bf16.mxu0 0
    %776 = vmatmul.mubr.bf16.gmra.mrb[0].mxu0 %v738
    %v777 = vpop.f32.mrb[0].mxu0
    %v778 = vadd.f32 0.0, %v777
    %v779 = vpop.f32.mrb[0].mxu0
    %v780 = vpop.f32.mrb[0].mxu0
    %v781 = vpop.f32.mrb[0].mxu0
    %782 = vdwg.mxu0
    %v784 = vsel %vm368, %v241, 0
    %v787 = vsel %vm368, %v301, 0
    %789 = vmatprep.subr.bf16.mxu0 0
    %790 = vmatpush1.bf16.xpose.msra.mxu0 %v787
    %791 = vmatprep.subr.bf16.mxu0 0
    %792 = vmatpush1.bf16.xpose.msra.mxu0 0
    %793 = vmatprep.subr.bf16.mxu0 0
    %794 = vmatpush1.bf16.xpose.msra.mxu0 0
    %795 = vmatprep.subr.bf16.mxu0 0
    %796 = vmatpush1.bf16.xpose.msra.mxu0 0
    %797 = vmatprep.subr.bf16.mxu0 0
    %798 = vmatpush1.bf16.xpose.msra.mxu0 0
    %799 = vmatprep.subr.bf16.mxu0 0
    %800 = vmatpush1.bf16.xpose.msra.mxu0 0
    %801 = vmatprep.subr.bf16.mxu0 0
    %802 = vmatpush1.bf16.xpose.msra.mxu0 0
    %803 = vmatprep.subr.bf16.mxu0 0
    %804 = vmatpush1.bf16.xpose.msra.mxu0 0
    %805 = vmatprep.subr.bf16.mxu0 0
    %806 = vmatpush1.bf16.xpose.msra.mxu0 0
    %807 = vmatprep.subr.bf16.mxu0 0
    %808 = vmatpush1.bf16.xpose.msra.mxu0 0
    %809 = vmatprep.subr.bf16.mxu0 0
    %810 = vmatpush1.bf16.xpose.msra.mxu0 0
    %811 = vmatprep.subr.bf16.mxu0 0
    %812 = vmatpush1.bf16.xpose.msra.mxu0 0
    %813 = vmatprep.subr.bf16.mxu0 0
    %814 = vmatpush1.bf16.xpose.msra.mxu0 0
    %815 = vmatprep.subr.bf16.mxu0 0
    %816 = vmatpush1.bf16.xpose.msra.mxu0 0
    %817 = vmatprep.subr.bf16.mxu0 0
    %818 = vmatpush1.bf16.xpose.msra.mxu0 0
    %819 = vmatprep.subr.bf16.mxu0 0
    %820 = vmatpush1.bf16.xpose.msra.mxu0 0
    %821 = vmatprep.mubr.bf16.mxu0 0
    %822 = vmatmul.mubr.bf16.gmra.mrb[0].mxu0 %v784
    %v823 = vpop.f32.mrb[0].mxu0
    %v824 = vadd.f32 0.0, %v823
    %v825 = vpop.f32.mrb[0].mxu0
    %v826 = vpop.f32.mrb[0].mxu0
    %v827 = vpop.f32.mrb[0].mxu0
    %828 = vdwg.mxu0
    %v830 = vsel %vm368, %v242, 0
    %v833 = vsel %vm368, %v302, 0
    %835 = vmatprep.subr.bf16.mxu0 0
    %836 = vmatpush1.bf16.xpose.msra.mxu0 %v833
    %837 = vmatprep.subr.bf16.mxu0 0
    %838 = vmatpush1.bf16.xpose.msra.mxu0 0
    %839 = vmatprep.subr.bf16.mxu0 0
    %840 = vmatpush1.bf16.xpose.msra.mxu0 0
    %841 = vmatprep.subr.bf16.mxu0 0
    %842 = vmatpush1.bf16.xpose.msra.mxu0 0
    %843 = vmatprep.subr.bf16.mxu0 0
    %844 = vmatpush1.bf16.xpose.msra.mxu0 0
    %845 = vmatprep.subr.bf16.mxu0 0
    %846 = vmatpush1.bf16.xpose.msra.mxu0 0
    %847 = vmatprep.subr.bf16.mxu0 0
    %848 = vmatpush1.bf16.xpose.msra.mxu0 0
    %849 = vmatprep.subr.bf16.mxu0 0
    %850 = vmatpush1.bf16.xpose.msra.mxu0 0
    %851 = vmatprep.subr.bf16.mxu0 0
    %852 = vmatpush1.bf16.xpose.msra.mxu0 0
    %853 = vmatprep.subr.bf16.mxu0 0
    %854 = vmatpush1.bf16.xpose.msra.mxu0 0
    %855 = vmatprep.subr.bf16.mxu0 0
    %856 = vmatpush1.bf16.xpose.msra.mxu0 0
    %857 = vmatprep.subr.bf16.mxu0 0
    %858 = vmatpush1.bf16.xpose.msra.mxu0 0
    %859 = vmatprep.subr.bf16.mxu0 0
    %860 = vmatpush1.bf16.xpose.msra.mxu0 0
    %861 = vmatprep.subr.bf16.mxu0 0
    %862 = vmatpush1.bf16.xpose.msra.mxu0 0
    %863 = vmatprep.subr.bf16.mxu0 0
    %864 = vmatpush1.bf16.xpose.msra.mxu0 0
    %865 = vmatprep.subr.bf16.mxu0 0
    %866 = vmatpush1.bf16.xpose.msra.mxu0 0
    %867 = vmatprep.mubr.bf16.mxu0 0
    %868 = vmatmul.mubr.bf16.gmra.mrb[0].mxu0 %v830
    %v869 = vpop.f32.mrb[0].mxu0
    %v870 = vadd.f32 0.0, %v869
    %v871 = vpop.f32.mrb[0].mxu0
    %v872 = vpop.f32.mrb[0].mxu0
    %v873 = vpop.f32.mrb[0].mxu0
    %874 = vdwg.mxu0
    %v876 = vsel %vm368, %v243, 0
    %v879 = vsel %vm368, %v303, 0
    %881 = vmatprep.subr.bf16.mxu0 0
    %882 = vmatpush1.bf16.xpose.msra.mxu0 %v879
    %883 = vmatprep.subr.bf16.mxu0 0
    %884 = vmatpush1.bf16.xpose.msra.mxu0 0
    %885 = vmatprep.subr.bf16.mxu0 0
    %886 = vmatpush1.bf16.xpose.msra.mxu0 0
    %887 = vmatprep.subr.bf16.mxu0 0
    %888 = vmatpush1.bf16.xpose.msra.mxu0 0
    %889 = vmatprep.subr.bf16.mxu0 0
    %890 = vmatpush1.bf16.xpose.msra.mxu0 0
    %891 = vmatprep.subr.bf16.mxu0 0
    %892 = vmatpush1.bf16.xpose.msra.mxu0 0
    %893 = vmatprep.subr.bf16.mxu0 0
    %894 = vmatpush1.bf16.xpose.msra.mxu0 0
    %895 = vmatprep.subr.bf16.mxu0 0
    %896 = vmatpush1.bf16.xpose.msra.mxu0 0
    %897 = vmatprep.subr.bf16.mxu0 0
    %898 = vmatpush1.bf16.xpose.msra.mxu0 0
    %899 = vmatprep.subr.bf16.mxu0 0
    %900 = vmatpush1.bf16.xpose.msra.mxu0 0
    %901 = vmatprep.subr.bf16.mxu0 0
    %902 = vmatpush1.bf16.xpose.msra.mxu0 0
    %903 = vmatprep.subr.bf16.mxu0 0
    %904 = vmatpush1.bf16.xpose.msra.mxu0 0
    %905 = vmatprep.subr.bf16.mxu0 0
    %906 = vmatpush1.bf16.xpose.msra.mxu0 0
    %907 = vmatprep.subr.bf16.mxu0 0
    %908 = vmatpush1.bf16.xpose.msra.mxu0 0
    %909 = vmatprep.subr.bf16.mxu0 0
    %910 = vmatpush1.bf16.xpose.msra.mxu0 0
    %911 = vmatprep.subr.bf16.mxu0 0
    %912 = vmatpush1.bf16.xpose.msra.mxu0 0
    %913 = vmatprep.mubr.bf16.mxu0 0
    %914 = vmatmul.mubr.bf16.gmra.mrb[0].mxu0 %v876
    %v915 = vpop.f32.mrb[0].mxu0
    %v916 = vadd.f32 0.0, %v915
    %v917 = vpop.f32.mrb[0].mxu0
    %v918 = vpop.f32.mrb[0].mxu0
    %v919 = vpop.f32.mrb[0].mxu0
    %920 = vdwg.mxu0
    %v922 = vsel %vm368, %v244, 0
    %v925 = vsel %vm368, %v304, 0
    %927 = vmatprep.subr.bf16.mxu0 0
    %928 = vmatpush1.bf16.xpose.msra.mxu0 %v925
    %929 = vmatprep.subr.bf16.mxu0 0
    %930 = vmatpush1.bf16.xpose.msra.mxu0 0
    %931 = vmatprep.subr.bf16.mxu0 0
    %932 = vmatpush1.bf16.xpose.msra.mxu0 0
    %933 = vmatprep.subr.bf16.mxu0 0
    %934 = vmatpush1.bf16.xpose.msra.mxu0 0
    %935 = vmatprep.subr.bf16.mxu0 0
    %936 = vmatpush1.bf16.xpose.msra.mxu0 0
    %937 = vmatprep.subr.bf16.mxu0 0
    %938 = vmatpush1.bf16.xpose.msra.mxu0 0
    %939 = vmatprep.subr.bf16.mxu0 0
    %940 = vmatpush1.bf16.xpose.msra.mxu0 0
    %941 = vmatprep.subr.bf16.mxu0 0
    %942 = vmatpush1.bf16.xpose.msra.mxu0 0
    %943 = vmatprep.subr.bf16.mxu0 0
    %944 = vmatpush1.bf16.xpose.msra.mxu0 0
    %945 = vmatprep.subr.bf16.mxu0 0
    %946 = vmatpush1.bf16.xpose.msra.mxu0 0
    %947 = vmatprep.subr.bf16.mxu0 0
    %948 = vmatpush1.bf16.xpose.msra.mxu0 0
    %949 = vmatprep.subr.bf16.mxu0 0
    %950 = vmatpush1.bf16.xpose.msra.mxu0 0
    %951 = vmatprep.subr.bf16.mxu0 0
    %952 = vmatpush1.bf16.xpose.msra.mxu0 0
    %953 = vmatprep.subr.bf16.mxu0 0
    %954 = vmatpush1.bf16.xpose.msra.mxu0 0
    %955 = vmatprep.subr.bf16.mxu0 0
    %956 = vmatpush1.bf16.xpose.msra.mxu0 0
    %957 = vmatprep.subr.bf16.mxu0 0
    %958 = vmatpush1.bf16.xpose.msra.mxu0 0
    %959 = vmatprep.mubr.bf16.mxu0 0
    %960 = vmatmul.mubr.bf16.gmra.mrb[0].mxu0 %v922
    %v961 = vpop.f32.mrb[0].mxu0
    %v962 = vadd.f32 0.0, %v961
    %v963 = vpop.f32.mrb[0].mxu0
    %v964 = vpop.f32.mrb[0].mxu0
    %v965 = vpop.f32.mrb[0].mxu0
    %966 = vdwg.mxu0
    %v968 = vsel %vm368, %v245, 0
    %v971 = vsel %vm368, %v305, 0
    %973 = vmatprep.subr.bf16.mxu0 0
    %974 = vmatpush1.bf16.xpose.msra.mxu0 %v971
    %975 = vmatprep.subr.bf16.mxu0 0
    %976 = vmatpush1.bf16.xpose.msra.mxu0 0
    %977 = vmatprep.subr.bf16.mxu0 0
    %978 = vmatpush1.bf16.xpose.msra.mxu0 0
    %979 = vmatprep.subr.bf16.mxu0 0
    %980 = vmatpush1.bf16.xpose.msra.mxu0 0
    %981 = vmatprep.subr.bf16.mxu0 0
    %982 = vmatpush1.bf16.xpose.msra.mxu0 0
    %983 = vmatprep.subr.bf16.mxu0 0
    %984 = vmatpush1.bf16.xpose.msra.mxu0 0
    %985 = vmatprep.subr.bf16.mxu0 0
    %986 = vmatpush1.bf16.xpose.msra.mxu0 0
    %987 = vmatprep.subr.bf16.mxu0 0
    %988 = vmatpush1.bf16.xpose.msra.mxu0 0
    %989 = vmatprep.subr.bf16.mxu0 0
    %990 = vmatpush1.bf16.xpose.msra.mxu0 0
    %991 = vmatprep.subr.bf16.mxu0 0
    %992 = vmatpush1.bf16.xpose.msra.mxu0 0
    %993 = vmatprep.subr.bf16.mxu0 0
    %994 = vmatpush1.bf16.xpose.msra.mxu0 0
    %995 = vmatprep.subr.bf16.mxu0 0
    %996 = vmatpush1.bf16.xpose.msra.mxu0 0
    %997 = vmatprep.subr.bf16.mxu0 0
    %998 = vmatpush1.bf16.xpose.msra.mxu0 0
    %999 = vmatprep.subr.bf16.mxu0 0
    %1000 = vmatpush1.bf16.xpose.msra.mxu0 0
    %1001 = vmatprep.subr.bf16.mxu0 0
    %1002 = vmatpush1.bf16.xpose.msra.mxu0 0
    %1003 = vmatprep.subr.bf16.mxu0 0
    %1004 = vmatpush1.bf16.xpose.msra.mxu0 0
    %1005 = vmatprep.mubr.bf16.mxu0 0
    %1006 = vmatmul.mubr.bf16.gmra.mrb[0].mxu0 %v968
    %v1007 = vpop.f32.mrb[0].mxu0
    %v1008 = vadd.f32 0.0, %v1007
    %v1009 = vpop.f32.mrb[0].mxu0
    %v1010 = vpop.f32.mrb[0].mxu0
    %v1011 = vpop.f32.mrb[0].mxu0
    %1012 = vdwg.mxu0
    %v1014 = vsel %vm368, %v246, 0
    %v1017 = vsel %vm368, %v306, 0
    %1019 = vmatprep.subr.bf16.mxu0 0
    %1020 = vmatpush1.bf16.xpose.msra.mxu0 %v1017
    %1021 = vmatprep.subr.bf16.mxu0 0
    %1022 = vmatpush1.bf16.xpose.msra.mxu0 0
    %1023 = vmatprep.subr.bf16.mxu0 0
    %1024 = vmatpush1.bf16.xpose.msra.mxu0 0
    %1025 = vmatprep.subr.bf16.mxu0 0
    %1026 = vmatpush1.bf16.xpose.msra.mxu0 0
    %1027 = vmatprep.subr.bf16.mxu0 0
    %1028 = vmatpush1.bf16.xpose.msra.mxu0 0
    %1029 = vmatprep.subr.bf16.mxu0 0
    %1030 = vmatpush1.bf16.xpose.msra.mxu0 0
    %1031 = vmatprep.subr.bf16.mxu0 0
    %1032 = vmatpush1.bf16.xpose.msra.mxu0 0
    %1033 = vmatprep.subr.bf16.mxu0 0
    %1034 = vmatpush1.bf16.xpose.msra.mxu0 0
    %1035 = vmatprep.subr.bf16.mxu0 0
    %1036 = vmatpush1.bf16.xpose.msra.mxu0 0
    %1037 = vmatprep.subr.bf16.mxu0 0
    %1038 = vmatpush1.bf16.xpose.msra.mxu0 0
    %1039 = vmatprep.subr.bf16.mxu0 0
    %1040 = vmatpush1.bf16.xpose.msra.mxu0 0
    %1041 = vmatprep.subr.bf16.mxu0 0
    %1042 = vmatpush1.bf16.xpose.msra.mxu0 0
    %1043 = vmatprep.subr.bf16.mxu0 0
    %1044 = vmatpush1.bf16.xpose.msra.mxu0 0
    %1045 = vmatprep.subr.bf16.mxu0 0
    %1046 = vmatpush1.bf16.xpose.msra.mxu0 0
    %1047 = vmatprep.subr.bf16.mxu0 0
    %1048 = vmatpush1.bf16.xpose.msra.mxu0 0
    %1049 = vmatprep.subr.bf16.mxu0 0
    %1050 = vmatpush1.bf16.xpose.msra.mxu0 0
    %1051 = vmatprep.mubr.bf16.mxu0 0
    %1052 = vmatmul.mubr.bf16.gmra.mrb[0].mxu0 %v1014
    %v1053 = vpop.f32.mrb[0].mxu0
    %v1054 = vadd.f32 0.0, %v1053
    %v1055 = vpop.f32.mrb[0].mxu0
    %v1056 = vpop.f32.mrb[0].mxu0
    %v1057 = vpop.f32.mrb[0].mxu0
    %1058 = vdwg.mxu0
    %v1060 = vsel %vm368, %v247, 0
    %v1063 = vsel %vm368, %v307, 0
    %1065 = vmatprep.subr.bf16.mxu0 0
    %1066 = vmatpush1.bf16.xpose.msra.mxu0 %v1063
    %1067 = vmatprep.subr.bf16.mxu0 0
    %1068 = vmatpush1.bf16.xpose.msra.mxu0 0
    %1069 = vmatprep.subr.bf16.mxu0 0
    %1070 = vmatpush1.bf16.xpose.msra.mxu0 0
    %1071 = vmatprep.subr.bf16.mxu0 0
    %1072 = vmatpush1.bf16.xpose.msra.mxu0 0
    %1073 = vmatprep.subr.bf16.mxu0 0
    %1074 = vmatpush1.bf16.xpose.msra.mxu0 0
    %1075 = vmatprep.subr.bf16.mxu0 0
    %1076 = vmatpush1.bf16.xpose.msra.mxu0 0
    %1077 = vmatprep.subr.bf16.mxu0 0
    %1078 = vmatpush1.bf16.xpose.msra.mxu0 0
    %1079 = vmatprep.subr.bf16.mxu0 0
    %1080 = vmatpush1.bf16.xpose.msra.mxu0 0
    %1081 = vmatprep.subr.bf16.mxu0 0
    %1082 = vmatpush1.bf16.xpose.msra.mxu0 0
    %1083 = vmatprep.subr.bf16.mxu0 0
    %1084 = vmatpush1.bf16.xpose.msra.mxu0 0
    %1085 = vmatprep.subr.bf16.mxu0 0
    %1086 = vmatpush1.bf16.xpose.msra.mxu0 0
    %1087 = vmatprep.subr.bf16.mxu0 0
    %1088 = vmatpush1.bf16.xpose.msra.mxu0 0
    %1089 = vmatprep.subr.bf16.mxu0 0
    %1090 = vmatpush1.bf16.xpose.msra.mxu0 0
    %1091 = vmatprep.subr.bf16.mxu0 0
    %1092 = vmatpush1.bf16.xpose.msra.mxu0 0
    %1093 = vmatprep.subr.bf16.mxu0 0
    %1094 = vmatpush1.bf16.xpose.msra.mxu0 0
    %1095 = vmatprep.subr.bf16.mxu0 0
    %1096 = vmatpush1.bf16.xpose.msra.mxu0 0
    %1097 = vmatprep.mubr.bf16.mxu0 0
    %1098 = vmatmul.mubr.bf16.gmra.mrb[0].mxu0 %v1060
    %v1099 = vpop.f32.mrb[0].mxu0
    %v1100 = vadd.f32 0.0, %v1099
    %v1101 = vpop.f32.mrb[0].mxu0
    %v1102 = vpop.f32.mrb[0].mxu0
    %v1103 = vpop.f32.mrb[0].mxu0
    %1104 = vdwg.mxu0
    %vm1105 = vcmask 64512
    %v1106 = vsel %vm1105, %v410, -inf
    %1107 = vmax.xlane.f32.xlu0 %v1106
    %v1108 = vpop.xlane.xlu0 %1107
    %v1109 = vsel %vm1105, %v456, -inf
    %1110 = vmax.xlane.f32.xlu0 %v1109
    %v1111 = vpop.xlane.xlu0 %1110
    %v1112 = vsel %vm1105, %v502, -inf
    %1113 = vmax.xlane.f32.xlu0 %v1112
    %v1114 = vpop.xlane.xlu0 %1113
    %v1115 = vsel %vm1105, %v548, -inf
    %1116 = vmax.xlane.f32.xlu0 %v1115
    %v1117 = vpop.xlane.xlu0 %1116
    %v1118 = vsel %vm1105, %v594, -inf
    %1119 = vmax.xlane.f32.xlu0 %v1118
    %v1120 = vpop.xlane.xlu0 %1119
    %v1121 = vsel %vm1105, %v640, -inf
    %1122 = vmax.xlane.f32.xlu0 %v1121
    %v1123 = vpop.xlane.xlu0 %1122
    %v1124 = vsel %vm1105, %v686, -inf
    %1125 = vmax.xlane.f32.xlu0 %v1124
    %v1126 = vpop.xlane.xlu0 %1125
    %v1127 = vsel %vm1105, %v732, -inf
    %1128 = vmax.xlane.f32.xlu0 %v1127
    %v1129 = vpop.xlane.xlu0 %1128
    %v1130 = vsel %vm1105, %v778, -inf
    %1131 = vmax.xlane.f32.xlu0 %v1130
    %v1132 = vpop.xlane.xlu0 %1131
    %v1133 = vsel %vm1105, %v824, -inf
    %1134 = vmax.xlane.f32.xlu0 %v1133
    %v1135 = vpop.xlane.xlu0 %1134
    %v1136 = vsel %vm1105, %v870, -inf
    %1137 = vmax.xlane.f32.xlu0 %v1136
    %v1138 = vpop.xlane.xlu0 %1137
    %v1139 = vsel %vm1105, %v916, -inf
    %1140 = vmax.xlane.f32.xlu0 %v1139
    %v1141 = vpop.xlane.xlu0 %1140
    %v1142 = vsel %vm1105, %v962, -inf
    %1143 = vmax.xlane.f32.xlu0 %v1142
    %v1144 = vpop.xlane.xlu0 %1143
    %v1145 = vsel %vm1105, %v1008, -inf
    %1146 = vmax.xlane.f32.xlu0 %v1145
    %v1147 = vpop.xlane.xlu0 %1146
    %v1148 = vsel %vm1105, %v1054, -inf
    %1149 = vmax.xlane.f32.xlu0 %v1148
    %v1150 = vpop.xlane.xlu0 %1149
    %v1151 = vsel %vm1105, %v1100, -inf
    %1152 = vmax.xlane.f32.xlu0 %v1151
    %v1153 = vpop.xlane.xlu0 %1152
    %v1154 = vsub.f32 %v410, %v1108
    %v1155 = vsub.f32 %v456, %v1111
    %v1156 = vsub.f32 %v502, %v1114
    %v1157 = vsub.f32 %v548, %v1117
    %v1158 = vsub.f32 %v594, %v1120
    %v1159 = vsub.f32 %v640, %v1123
    %v1160 = vsub.f32 %v686, %v1126
    %v1161 = vsub.f32 %v732, %v1129
    %v1162 = vsub.f32 %v778, %v1132
    %v1163 = vsub.f32 %v824, %v1135
    %v1164 = vsub.f32 %v870, %v1138
    %v1165 = vsub.f32 %v916, %v1141
    %v1166 = vsub.f32 %v962, %v1144
    %v1167 = vsub.f32 %v1008, %v1147
    %v1168 = vsub.f32 %v1054, %v1150
    %v1169 = vsub.f32 %v1100, %v1153
    %v1170 = vmul.f32 %v1154, 1.442695
    %v1171 = vpow.pop %v1170
    %v1172 = vmul.f32 %v1155, 1.442695
    %v1173 = vpow.pop %v1172
    %v1174 = vmul.f32 %v1156, 1.442695
    %v1175 = vpow.pop %v1174
    %v1176 = vmul.f32 %v1157, 1.442695
    %v1177 = vpow.pop %v1176
    %v1178 = vmul.f32 %v1158, 1.442695
    %v1179 = vpow.pop %v1178
    %v1180 = vmul.f32 %v1159, 1.442695
    %v1181 = vpow.pop %v1180
    %v1182 = vmul.f32 %v1160, 1.442695
    %v1183 = vpow.pop %v1182
    %v1184 = vmul.f32 %v1161, 1.442695
    %v1185 = vpow.pop %v1184
    %v1186 = vmul.f32 %v1162, 1.442695
    %v1187 = vpow.pop %v1186
    %v1188 = vmul.f32 %v1163, 1.442695
    %v1189 = vpow.pop %v1188
    %v1190 = vmul.f32 %v1164, 1.442695
    %v1191 = vpow.pop %v1190
    %v1192 = vmul.f32 %v1165, 1.442695
    %v1193 = vpow.pop %v1192
    %v1194 = vmul.f32 %v1166, 1.442695
    %v1195 = vpow.pop %v1194
    %v1196 = vmul.f32 %v1167, 1.442695
    %v1197 = vpow.pop %v1196
    %v1198 = vmul.f32 %v1168, 1.442695
    %v1199 = vpow.pop %v1198
    %v1200 = vmul.f32 %v1169, 1.442695
    %v1201 = vpow.pop %v1200
    %v1202 = vsel %vm1105, %v1171, 0.0
    %1203 = vadd.xlane.f32.xlu0 %v1202
    %v1204 = vpop.xlane.xlu0 %1203
    %v1205 = vsel %vm1105, %v1173, 0.0
    %1206 = vadd.xlane.f32.xlu0 %v1205
    %v1207 = vpop.xlane.xlu0 %1206
    %v1208 = vsel %vm1105, %v1175, 0.0
    %1209 = vadd.xlane.f32.xlu0 %v1208
    %v1210 = vpop.xlane.xlu0 %1209
    %v1211 = vsel %vm1105, %v1177, 0.0
    %1212 = vadd.xlane.f32.xlu0 %v1211
    %v1213 = vpop.xlane.xlu0 %1212
    %v1214 = vsel %vm1105, %v1179, 0.0
    %1215 = vadd.xlane.f32.xlu0 %v1214
    %v1216 = vpop.xlane.xlu0 %1215
    %v1217 = vsel %vm1105, %v1181, 0.0
    %1218 = vadd.xlane.f32.xlu0 %v1217
    %v1219 = vpop.xlane.xlu0 %1218
    %v1220 = vsel %vm1105, %v1183, 0.0
    %1221 = vadd.xlane.f32.xlu0 %v1220
    %v1222 = vpop.xlane.xlu0 %1221
    %v1223 = vsel %vm1105, %v1185, 0.0
    %1224 = vadd.xlane.f32.xlu0 %v1223
    %v1225 = vpop.xlane.xlu0 %1224
    %v1226 = vsel %vm1105, %v1187, 0.0
    %1227 = vadd.xlane.f32.xlu0 %v1226
    %v1228 = vpop.xlane.xlu0 %1227
    %v1229 = vsel %vm1105, %v1189, 0.0
    %1230 = vadd.xlane.f32.xlu0 %v1229
    %v1231 = vpop.xlane.xlu0 %1230
    %v1232 = vsel %vm1105, %v1191, 0.0
    %1233 = vadd.xlane.f32.xlu0 %v1232
    %v1234 = vpop.xlane.xlu0 %1233
    %v1235 = vsel %vm1105, %v1193, 0.0
    %1236 = vadd.xlane.f32.xlu0 %v1235
    %v1237 = vpop.xlane.xlu0 %1236
    %v1238 = vsel %vm1105, %v1195, 0.0
    %1239 = vadd.xlane.f32.xlu0 %v1238
    %v1240 = vpop.xlane.xlu0 %1239
    %v1241 = vsel %vm1105, %v1197, 0.0
    %1242 = vadd.xlane.f32.xlu0 %v1241
    %v1243 = vpop.xlane.xlu0 %1242
    %v1244 = vsel %vm1105, %v1199, 0.0
    %1245 = vadd.xlane.f32.xlu0 %v1244
    %v1246 = vpop.xlane.xlu0 %1245
    %v1247 = vsel %vm1105, %v1201, 0.0
    %1248 = vadd.xlane.f32.xlu0 %v1247
    %v1249 = vpop.xlane.xlu0 %1248
    %v1250 = vrcp.pop %v1204
    %v1251 = vrcp.pop %v1207
    %v1252 = vrcp.pop %v1210
    %v1253 = vrcp.pop %v1213
    %v1254 = vrcp.pop %v1216
    %v1255 = vrcp.pop %v1219
    %v1256 = vrcp.pop %v1222
    %v1257 = vrcp.pop %v1225
    %v1258 = vrcp.pop %v1228
    %v1259 = vrcp.pop %v1231
    %v1260 = vrcp.pop %v1234
    %v1261 = vrcp.pop %v1237
    %v1262 = vrcp.pop %v1240
    %v1263 = vrcp.pop %v1243
    %v1264 = vrcp.pop %v1246
    %v1265 = vrcp.pop %v1249
    %v1266 = vmul.f32 %v1171, %v1250
    %v1267 = vmul.f32 %v1173, %v1251
    %v1268 = vmul.f32 %v1175, %v1252
    %v1269 = vmul.f32 %v1177, %v1253
    %v1270 = vmul.f32 %v1179, %v1254
    %v1271 = vmul.f32 %v1181, %v1255
    %v1272 = vmul.f32 %v1183, %v1256
    %v1273 = vmul.f32 %v1185, %v1257
    %v1274 = vmul.f32 %v1187, %v1258
    %v1275 = vmul.f32 %v1189, %v1259
    %v1276 = vmul.f32 %v1191, %v1260
    %v1277 = vmul.f32 %v1193, %v1261
    %v1278 = vmul.f32 %v1195, %v1262
    %v1279 = vmul.f32 %v1197, %v1263
    %v1280 = vmul.f32 %v1199, %v1264
    %v1281 = vmul.f32 %v1201, %v1265
    %v1282 = vpack.c.bf16 %v1266, %v1266
    %v1283 = vpack.c.bf16 %v1267, %v1267
    %v1284 = vpack.c.bf16 %v1268, %v1268
    %v1285 = vpack.c.bf16 %v1269, %v1269
    %v1286 = vpack.c.bf16 %v1270, %v1270
    %v1287 = vpack.c.bf16 %v1271, %v1271
    %v1288 = vpack.c.bf16 %v1272, %v1272
    %v1289 = vpack.c.bf16 %v1273, %v1273
    %v1290 = vpack.c.bf16 %v1274, %v1274
    %v1291 = vpack.c.bf16 %v1275, %v1275
    %v1292 = vpack.c.bf16 %v1276, %v1276
    %v1293 = vpack.c.bf16 %v1277, %v1277
    %v1294 = vpack.c.bf16 %v1278, %v1278
    %v1295 = vpack.c.bf16 %v1279, %v1279
    %v1296 = vpack.c.bf16 %v1280, %v1280
    %v1297 = vpack.c.bf16 %v1281, %v1281
    %1299 = vrot.lane.b32.xlu0 %v352, 96
    %v1300 = vpop.permute.xlu0 %1299
    %v1302 = vsel %vm1105, %v1282, 0
    %vm1304 = vcmask 1043456
    %v1306 = vsel %vm1304, %v1300, 0
    %1308 = vmatprep.subr.bf16.mxu0 0
    %1309 = vmatpush1.bf16.msra.mxu0 %v1306
    %1310 = vmatprep.subr.bf16.mxu0 0
    %1311 = vmatpush1.bf16.msra.mxu0 0
    %1312 = vmatprep.subr.bf16.mxu0 0
    %1313 = vmatpush1.bf16.msra.mxu0 0
    %1314 = vmatprep.subr.bf16.mxu0 0
    %1315 = vmatpush1.bf16.msra.mxu0 0
    %1316 = vmatprep.subr.bf16.mxu0 0
    %1317 = vmatpush1.bf16.msra.mxu0 0
    %1318 = vmatprep.subr.bf16.mxu0 0
    %1319 = vmatpush1.bf16.msra.mxu0 0
    %1320 = vmatprep.subr.bf16.mxu0 0
    %1321 = vmatpush1.bf16.msra.mxu0 0
    %1322 = vmatprep.subr.bf16.mxu0 0
    %1323 = vmatpush1.bf16.msra.mxu0 0
    %1324 = vmatprep.subr.bf16.mxu0 0
    %1325 = vmatpush1.bf16.msra.mxu0 0
    %1326 = vmatprep.subr.bf16.mxu0 0
    %1327 = vmatpush1.bf16.msra.mxu0 0
    %1328 = vmatprep.subr.bf16.mxu0 0
    %1329 = vmatpush1.bf16.msra.mxu0 0
    %1330 = vmatprep.subr.bf16.mxu0 0
    %1331 = vmatpush1.bf16.msra.mxu0 0
    %1332 = vmatprep.subr.bf16.mxu0 0
    %1333 = vmatpush1.bf16.msra.mxu0 0
    %1334 = vmatprep.subr.bf16.mxu0 0
    %1335 = vmatpush1.bf16.msra.mxu0 0
    %1336 = vmatprep.subr.bf16.mxu0 0
    %1337 = vmatpush1.bf16.msra.mxu0 0
    %1338 = vmatprep.subr.bf16.mxu0 0
    %1339 = vmatpush1.bf16.msra.mxu0 0
    %1340 = vmatprep.mubr.bf16.mxu0 0
    %1341 = vmatmul.mubr.bf16.gmra.mrb[0].mxu0 %v1302
    %v1342 = vpop.f32.mrb[0].mxu0
    %v1343 = vadd.f32 0.0, %v1342
    %v1344 = vpop.f32.mrb[0].mxu0
    %v1345 = vpop.f32.mrb[0].mxu0
    %v1346 = vpop.f32.mrb[0].mxu0
    %1347 = vdwg.mxu0
    %1349 = vrot.lane.b32.xlu0 %v353, 96
    %v1350 = vpop.permute.xlu0 %1349
    %v1352 = vsel %vm1105, %v1283, 0
    %v1355 = vsel %vm1304, %v1350, 0
    %1357 = vmatprep.subr.bf16.mxu0 0
    %1358 = vmatpush1.bf16.msra.mxu0 %v1355
    %1359 = vmatprep.subr.bf16.mxu0 0
    %1360 = vmatpush1.bf16.msra.mxu0 0
    %1361 = vmatprep.subr.bf16.mxu0 0
    %1362 = vmatpush1.bf16.msra.mxu0 0
    %1363 = vmatprep.subr.bf16.mxu0 0
    %1364 = vmatpush1.bf16.msra.mxu0 0
    %1365 = vmatprep.subr.bf16.mxu0 0
    %1366 = vmatpush1.bf16.msra.mxu0 0
    %1367 = vmatprep.subr.bf16.mxu0 0
    %1368 = vmatpush1.bf16.msra.mxu0 0
    %1369 = vmatprep.subr.bf16.mxu0 0
    %1370 = vmatpush1.bf16.msra.mxu0 0
    %1371 = vmatprep.subr.bf16.mxu0 0
    %1372 = vmatpush1.bf16.msra.mxu0 0
    %1373 = vmatprep.subr.bf16.mxu0 0
    %1374 = vmatpush1.bf16.msra.mxu0 0
    %1375 = vmatprep.subr.bf16.mxu0 0
    %1376 = vmatpush1.bf16.msra.mxu0 0
    %1377 = vmatprep.subr.bf16.mxu0 0
    %1378 = vmatpush1.bf16.msra.mxu0 0
    %1379 = vmatprep.subr.bf16.mxu0 0
    %1380 = vmatpush1.bf16.msra.mxu0 0
    %1381 = vmatprep.subr.bf16.mxu0 0
    %1382 = vmatpush1.bf16.msra.mxu0 0
    %1383 = vmatprep.subr.bf16.mxu0 0
    %1384 = vmatpush1.bf16.msra.mxu0 0
    %1385 = vmatprep.subr.bf16.mxu0 0
    %1386 = vmatpush1.bf16.msra.mxu0 0
    %1387 = vmatprep.subr.bf16.mxu0 0
    %1388 = vmatpush1.bf16.msra.mxu0 0
    %1389 = vmatprep.mubr.bf16.mxu0 0
    %1390 = vmatmul.mubr.bf16.gmra.mrb[0].mxu0 %v1352
    %v1391 = vpop.f32.mrb[0].mxu0
    %v1392 = vadd.f32 0.0, %v1391
    %v1393 = vpop.f32.mrb[0].mxu0
    %v1394 = vpop.f32.mrb[0].mxu0
    %v1395 = vpop.f32.mrb[0].mxu0
    %1396 = vdwg.mxu0
    %1398 = vrot.lane.b32.xlu0 %v354, 96
    %v1399 = vpop.permute.xlu0 %1398
    %v1401 = vsel %vm1105, %v1284, 0
    %v1404 = vsel %vm1304, %v1399, 0
    %1406 = vmatprep.subr.bf16.mxu0 0
    %1407 = vmatpush1.bf16.msra.mxu0 %v1404
    %1408 = vmatprep.subr.bf16.mxu0 0
    %1409 = vmatpush1.bf16.msra.mxu0 0
    %1410 = vmatprep.subr.bf16.mxu0 0
    %1411 = vmatpush1.bf16.msra.mxu0 0
    %1412 = vmatprep.subr.bf16.mxu0 0
    %1413 = vmatpush1.bf16.msra.mxu0 0
    %1414 = vmatprep.subr.bf16.mxu0 0
    %1415 = vmatpush1.bf16.msra.mxu0 0
    %1416 = vmatprep.subr.bf16.mxu0 0
    %1417 = vmatpush1.bf16.msra.mxu0 0
    %1418 = vmatprep.subr.bf16.mxu0 0
    %1419 = vmatpush1.bf16.msra.mxu0 0
    %1420 = vmatprep.subr.bf16.mxu0 0
    %1421 = vmatpush1.bf16.msra.mxu0 0
    %1422 = vmatprep.subr.bf16.mxu0 0
    %1423 = vmatpush1.bf16.msra.mxu0 0
    %1424 = vmatprep.subr.bf16.mxu0 0
    %1425 = vmatpush1.bf16.msra.mxu0 0
    %1426 = vmatprep.subr.bf16.mxu0 0
    %1427 = vmatpush1.bf16.msra.mxu0 0
    %1428 = vmatprep.subr.bf16.mxu0 0
    %1429 = vmatpush1.bf16.msra.mxu0 0
    %1430 = vmatprep.subr.bf16.mxu0 0
    %1431 = vmatpush1.bf16.msra.mxu0 0
    %1432 = vmatprep.subr.bf16.mxu0 0
    %1433 = vmatpush1.bf16.msra.mxu0 0
    %1434 = vmatprep.subr.bf16.mxu0 0
    %1435 = vmatpush1.bf16.msra.mxu0 0
    %1436 = vmatprep.subr.bf16.mxu0 0
    %1437 = vmatpush1.bf16.msra.mxu0 0
    %1438 = vmatprep.mubr.bf16.mxu0 0
    %1439 = vmatmul.mubr.bf16.gmra.mrb[0].mxu0 %v1401
    %v1440 = vpop.f32.mrb[0].mxu0
    %v1441 = vadd.f32 0.0, %v1440
    %v1442 = vpop.f32.mrb[0].mxu0
    %v1443 = vpop.f32.mrb[0].mxu0
    %v1444 = vpop.f32.mrb[0].mxu0
    %1445 = vdwg.mxu0
    %1447 = vrot.lane.b32.xlu0 %v355, 96
    %v1448 = vpop.permute.xlu0 %1447
    %v1450 = vsel %vm1105, %v1285, 0
    %v1453 = vsel %vm1304, %v1448, 0
    %1455 = vmatprep.subr.bf16.mxu0 0
    %1456 = vmatpush1.bf16.msra.mxu0 %v1453
    %1457 = vmatprep.subr.bf16.mxu0 0
    %1458 = vmatpush1.bf16.msra.mxu0 0
    %1459 = vmatprep.subr.bf16.mxu0 0
    %1460 = vmatpush1.bf16.msra.mxu0 0
    %1461 = vmatprep.subr.bf16.mxu0 0
    %1462 = vmatpush1.bf16.msra.mxu0 0
    %1463 = vmatprep.subr.bf16.mxu0 0
    %1464 = vmatpush1.bf16.msra.mxu0 0
    %1465 = vmatprep.subr.bf16.mxu0 0
    %1466 = vmatpush1.bf16.msra.mxu0 0
    %1467 = vmatprep.subr.bf16.mxu0 0
    %1468 = vmatpush1.bf16.msra.mxu0 0
    %1469 = vmatprep.subr.bf16.mxu0 0
    %1470 = vmatpush1.bf16.msra.mxu0 0
    %1471 = vmatprep.subr.bf16.mxu0 0
    %1472 = vmatpush1.bf16.msra.mxu0 0
    %1473 = vmatprep.subr.bf16.mxu0 0
    %1474 = vmatpush1.bf16.msra.mxu0 0
    %1475 = vmatprep.subr.bf16.mxu0 0
    %1476 = vmatpush1.bf16.msra.mxu0 0
    %1477 = vmatprep.subr.bf16.mxu0 0
    %1478 = vmatpush1.bf16.msra.mxu0 0
    %1479 = vmatprep.subr.bf16.mxu0 0
    %1480 = vmatpush1.bf16.msra.mxu0 0
    %1481 = vmatprep.subr.bf16.mxu0 0
    %1482 = vmatpush1.bf16.msra.mxu0 0
    %1483 = vmatprep.subr.bf16.mxu0 0
    %1484 = vmatpush1.bf16.msra.mxu0 0
    %1485 = vmatprep.subr.bf16.mxu0 0
    %1486 = vmatpush1.bf16.msra.mxu0 0
    %1487 = vmatprep.mubr.bf16.mxu0 0
    %1488 = vmatmul.mubr.bf16.gmra.mrb[0].mxu0 %v1450
    %v1489 = vpop.f32.mrb[0].mxu0
    %v1490 = vadd.f32 0.0, %v1489
    %v1491 = vpop.f32.mrb[0].mxu0
    %v1492 = vpop.f32.mrb[0].mxu0
    %v1493 = vpop.f32.mrb[0].mxu0
    %1494 = vdwg.mxu0
    %1496 = vrot.lane.b32.xlu0 %v356, 96
    %v1497 = vpop.permute.xlu0 %1496
    %v1499 = vsel %vm1105, %v1286, 0
    %v1502 = vsel %vm1304, %v1497, 0
    %1504 = vmatprep.subr.bf16.mxu0 0
    %1505 = vmatpush1.bf16.msra.mxu0 %v1502
    %1506 = vmatprep.subr.bf16.mxu0 0
    %1507 = vmatpush1.bf16.msra.mxu0 0
    %1508 = vmatprep.subr.bf16.mxu0 0
    %1509 = vmatpush1.bf16.msra.mxu0 0
    %1510 = vmatprep.subr.bf16.mxu0 0
    %1511 = vmatpush1.bf16.msra.mxu0 0
    %1512 = vmatprep.subr.bf16.mxu0 0
    %1513 = vmatpush1.bf16.msra.mxu0 0
    %1514 = vmatprep.subr.bf16.mxu0 0
    %1515 = vmatpush1.bf16.msra.mxu0 0
    %1516 = vmatprep.subr.bf16.mxu0 0
    %1517 = vmatpush1.bf16.msra.mxu0 0
    %1518 = vmatprep.subr.bf16.mxu0 0
    %1519 = vmatpush1.bf16.msra.mxu0 0
    %1520 = vmatprep.subr.bf16.mxu0 0
    %1521 = vmatpush1.bf16.msra.mxu0 0
    %1522 = vmatprep.subr.bf16.mxu0 0
    %1523 = vmatpush1.bf16.msra.mxu0 0
    %1524 = vmatprep.subr.bf16.mxu0 0
    %1525 = vmatpush1.bf16.msra.mxu0 0
    %1526 = vmatprep.subr.bf16.mxu0 0
    %1527 = vmatpush1.bf16.msra.mxu0 0
    %1528 = vmatprep.subr.bf16.mxu0 0
    %1529 = vmatpush1.bf16.msra.mxu0 0
    %1530 = vmatprep.subr.bf16.mxu0 0
    %1531 = vmatpush1.bf16.msra.mxu0 0
    %1532 = vmatprep.subr.bf16.mxu0 0
    %1533 = vmatpush1.bf16.msra.mxu0 0
    %1534 = vmatprep.subr.bf16.mxu0 0
    %1535 = vmatpush1.bf16.msra.mxu0 0
    %1536 = vmatprep.mubr.bf16.mxu0 0
    %1537 = vmatmul.mubr.bf16.gmra.mrb[0].mxu0 %v1499
    %v1538 = vpop.f32.mrb[0].mxu0
    %v1539 = vadd.f32 0.0, %v1538
    %v1540 = vpop.f32.mrb[0].mxu0
    %v1541 = vpop.f32.mrb[0].mxu0
    %v1542 = vpop.f32.mrb[0].mxu0
    %1543 = vdwg.mxu0
    %1545 = vrot.lane.b32.xlu0 %v357, 96
    %v1546 = vpop.permute.xlu0 %1545
    %v1548 = vsel %vm1105, %v1287, 0
    %v1551 = vsel %vm1304, %v1546, 0
    %1553 = vmatprep.subr.bf16.mxu0 0
    %1554 = vmatpush1.bf16.msra.mxu0 %v1551
    %1555 = vmatprep.subr.bf16.mxu0 0
    %1556 = vmatpush1.bf16.msra.mxu0 0
    %1557 = vmatprep.subr.bf16.mxu0 0
    %1558 = vmatpush1.bf16.msra.mxu0 0
    %1559 = vmatprep.subr.bf16.mxu0 0
    %1560 = vmatpush1.bf16.msra.mxu0 0
    %1561 = vmatprep.subr.bf16.mxu0 0
    %1562 = vmatpush1.bf16.msra.mxu0 0
    %1563 = vmatprep.subr.bf16.mxu0 0
    %1564 = vmatpush1.bf16.msra.mxu0 0
    %1565 = vmatprep.subr.bf16.mxu0 0
    %1566 = vmatpush1.bf16.msra.mxu0 0
    %1567 = vmatprep.subr.bf16.mxu0 0
    %1568 = vmatpush1.bf16.msra.mxu0 0
    %1569 = vmatprep.subr.bf16.mxu0 0
    %1570 = vmatpush1.bf16.msra.mxu0 0
    %1571 = vmatprep.subr.bf16.mxu0 0
    %1572 = vmatpush1.bf16.msra.mxu0 0
    %1573 = vmatprep.subr.bf16.mxu0 0
    %1574 = vmatpush1.bf16.msra.mxu0 0
    %1575 = vmatprep.subr.bf16.mxu0 0
    %1576 = vmatpush1.bf16.msra.mxu0 0
    %1577 = vmatprep.subr.bf16.mxu0 0
    %1578 = vmatpush1.bf16.msra.mxu0 0
    %1579 = vmatprep.subr.bf16.mxu0 0
    %1580 = vmatpush1.bf16.msra.mxu0 0
    %1581 = vmatprep.subr.bf16.mxu0 0
    %1582 = vmatpush1.bf16.msra.mxu0 0
    %1583 = vmatprep.subr.bf16.mxu0 0
    %1584 = vmatpush1.bf16.msra.mxu0 0
    %1585 = vmatprep.mubr.bf16.mxu0 0
    %1586 = vmatmul.mubr.bf16.gmra.mrb[0].mxu0 %v1548
    %v1587 = vpop.f32.mrb[0].mxu0
    %v1588 = vadd.f32 0.0, %v1587
    %v1589 = vpop.f32.mrb[0].mxu0
    %v1590 = vpop.f32.mrb[0].mxu0
    %v1591 = vpop.f32.mrb[0].mxu0
    %1592 = vdwg.mxu0
    %1594 = vrot.lane.b32.xlu0 %v358, 96
    %v1595 = vpop.permute.xlu0 %1594
    %v1597 = vsel %vm1105, %v1288, 0
    %v1600 = vsel %vm1304, %v1595, 0
    %1602 = vmatprep.subr.bf16.mxu0 0
    %1603 = vmatpush1.bf16.msra.mxu0 %v1600
    %1604 = vmatprep.subr.bf16.mxu0 0
    %1605 = vmatpush1.bf16.msra.mxu0 0
    %1606 = vmatprep.subr.bf16.mxu0 0
    %1607 = vmatpush1.bf16.msra.mxu0 0
    %1608 = vmatprep.subr.bf16.mxu0 0
    %1609 = vmatpush1.bf16.msra.mxu0 0
    %1610 = vmatprep.subr.bf16.mxu0 0
    %1611 = vmatpush1.bf16.msra.mxu0 0
    %1612 = vmatprep.subr.bf16.mxu0 0
    %1613 = vmatpush1.bf16.msra.mxu0 0
    %1614 = vmatprep.subr.bf16.mxu0 0
    %1615 = vmatpush1.bf16.msra.mxu0 0
    %1616 = vmatprep.subr.bf16.mxu0 0
    %1617 = vmatpush1.bf16.msra.mxu0 0
    %1618 = vmatprep.subr.bf16.mxu0 0
    %1619 = vmatpush1.bf16.msra.mxu0 0
    %1620 = vmatprep.subr.bf16.mxu0 0
    %1621 = vmatpush1.bf16.msra.mxu0 0
    %1622 = vmatprep.subr.bf16.mxu0 0
    %1623 = vmatpush1.bf16.msra.mxu0 0
    %1624 = vmatprep.subr.bf16.mxu0 0
    %1625 = vmatpush1.bf16.msra.mxu0 0
    %1626 = vmatprep.subr.bf16.mxu0 0
    %1627 = vmatpush1.bf16.msra.mxu0 0
    %1628 = vmatprep.subr.bf16.mxu0 0
    %1629 = vmatpush1.bf16.msra.mxu0 0
    %1630 = vmatprep.subr.bf16.mxu0 0
    %1631 = vmatpush1.bf16.msra.mxu0 0
    %1632 = vmatprep.subr.bf16.mxu0 0
    %1633 = vmatpush1.bf16.msra.mxu0 0
    %1634 = vmatprep.mubr.bf16.mxu0 0
    %1635 = vmatmul.mubr.bf16.gmra.mrb[0].mxu0 %v1597
    %v1636 = vpop.f32.mrb[0].mxu0
    %v1637 = vadd.f32 0.0, %v1636
    %v1638 = vpop.f32.mrb[0].mxu0
    %v1639 = vpop.f32.mrb[0].mxu0
    %v1640 = vpop.f32.mrb[0].mxu0
    %1641 = vdwg.mxu0
    %1643 = vrot.lane.b32.xlu0 %v359, 96
    %v1644 = vpop.permute.xlu0 %1643
    %v1646 = vsel %vm1105, %v1289, 0
    %v1649 = vsel %vm1304, %v1644, 0
    %1651 = vmatprep.subr.bf16.mxu0 0
    %1652 = vmatpush1.bf16.msra.mxu0 %v1649
    %1653 = vmatprep.subr.bf16.mxu0 0
    %1654 = vmatpush1.bf16.msra.mxu0 0
    %1655 = vmatprep.subr.bf16.mxu0 0
    %1656 = vmatpush1.bf16.msra.mxu0 0
    %1657 = vmatprep.subr.bf16.mxu0 0
    %1658 = vmatpush1.bf16.msra.mxu0 0
    %1659 = vmatprep.subr.bf16.mxu0 0
    %1660 = vmatpush1.bf16.msra.mxu0 0
    %1661 = vmatprep.subr.bf16.mxu0 0
    %1662 = vmatpush1.bf16.msra.mxu0 0
    %1663 = vmatprep.subr.bf16.mxu0 0
    %1664 = vmatpush1.bf16.msra.mxu0 0
    %1665 = vmatprep.subr.bf16.mxu0 0
    %1666 = vmatpush1.bf16.msra.mxu0 0
    %1667 = vmatprep.subr.bf16.mxu0 0
    %1668 = vmatpush1.bf16.msra.mxu0 0
    %1669 = vmatprep.subr.bf16.mxu0 0
    %1670 = vmatpush1.bf16.msra.mxu0 0
    %1671 = vmatprep.subr.bf16.mxu0 0
    %1672 = vmatpush1.bf16.msra.mxu0 0
    %1673 = vmatprep.subr.bf16.mxu0 0
    %1674 = vmatpush1.bf16.msra.mxu0 0
    %1675 = vmatprep.subr.bf16.mxu0 0
    %1676 = vmatpush1.bf16.msra.mxu0 0
    %1677 = vmatprep.subr.bf16.mxu0 0
    %1678 = vmatpush1.bf16.msra.mxu0 0
    %1679 = vmatprep.subr.bf16.mxu0 0
    %1680 = vmatpush1.bf16.msra.mxu0 0
    %1681 = vmatprep.subr.bf16.mxu0 0
    %1682 = vmatpush1.bf16.msra.mxu0 0
    %1683 = vmatprep.mubr.bf16.mxu0 0
    %1684 = vmatmul.mubr.bf16.gmra.mrb[0].mxu0 %v1646
    %v1685 = vpop.f32.mrb[0].mxu0
    %v1686 = vadd.f32 0.0, %v1685
    %v1687 = vpop.f32.mrb[0].mxu0
    %v1688 = vpop.f32.mrb[0].mxu0
    %v1689 = vpop.f32.mrb[0].mxu0
    %1690 = vdwg.mxu0
    %1692 = vrot.lane.b32.xlu0 %v360, 96
    %v1693 = vpop.permute.xlu0 %1692
    %v1695 = vsel %vm1105, %v1290, 0
    %v1698 = vsel %vm1304, %v1693, 0
    %1700 = vmatprep.subr.bf16.mxu0 0
    %1701 = vmatpush1.bf16.msra.mxu0 %v1698
    %1702 = vmatprep.subr.bf16.mxu0 0
    %1703 = vmatpush1.bf16.msra.mxu0 0
    %1704 = vmatprep.subr.bf16.mxu0 0
    %1705 = vmatpush1.bf16.msra.mxu0 0
    %1706 = vmatprep.subr.bf16.mxu0 0
    %1707 = vmatpush1.bf16.msra.mxu0 0
    %1708 = vmatprep.subr.bf16.mxu0 0
    %1709 = vmatpush1.bf16.msra.mxu0 0
    %1710 = vmatprep.subr.bf16.mxu0 0
    %1711 = vmatpush1.bf16.msra.mxu0 0
    %1712 = vmatprep.subr.bf16.mxu0 0
    %1713 = vmatpush1.bf16.msra.mxu0 0
    %1714 = vmatprep.subr.bf16.mxu0 0
    %1715 = vmatpush1.bf16.msra.mxu0 0
    %1716 = vmatprep.subr.bf16.mxu0 0
    %1717 = vmatpush1.bf16.msra.mxu0 0
    %1718 = vmatprep.subr.bf16.mxu0 0
    %1719 = vmatpush1.bf16.msra.mxu0 0
    %1720 = vmatprep.subr.bf16.mxu0 0
    %1721 = vmatpush1.bf16.msra.mxu0 0
    %1722 = vmatprep.subr.bf16.mxu0 0
    %1723 = vmatpush1.bf16.msra.mxu0 0
    %1724 = vmatprep.subr.bf16.mxu0 0
    %1725 = vmatpush1.bf16.msra.mxu0 0
    %1726 = vmatprep.subr.bf16.mxu0 0
    %1727 = vmatpush1.bf16.msra.mxu0 0
    %1728 = vmatprep.subr.bf16.mxu0 0
    %1729 = vmatpush1.bf16.msra.mxu0 0
    %1730 = vmatprep.subr.bf16.mxu0 0
    %1731 = vmatpush1.bf16.msra.mxu0 0
    %1732 = vmatprep.mubr.bf16.mxu0 0
    %1733 = vmatmul.mubr.bf16.gmra.mrb[0].mxu0 %v1695
    %v1734 = vpop.f32.mrb[0].mxu0
    %v1735 = vadd.f32 0.0, %v1734
    %v1736 = vpop.f32.mrb[0].mxu0
    %v1737 = vpop.f32.mrb[0].mxu0
    %v1738 = vpop.f32.mrb[0].mxu0
    %1739 = vdwg.mxu0
    %1741 = vrot.lane.b32.xlu0 %v361, 96
    %v1742 = vpop.permute.xlu0 %1741
    %v1744 = vsel %vm1105, %v1291, 0
    %v1747 = vsel %vm1304, %v1742, 0
    %1749 = vmatprep.subr.bf16.mxu0 0
    %1750 = vmatpush1.bf16.msra.mxu0 %v1747
    %1751 = vmatprep.subr.bf16.mxu0 0
    %1752 = vmatpush1.bf16.msra.mxu0 0
    %1753 = vmatprep.subr.bf16.mxu0 0
    %1754 = vmatpush1.bf16.msra.mxu0 0
    %1755 = vmatprep.subr.bf16.mxu0 0
    %1756 = vmatpush1.bf16.msra.mxu0 0
    %1757 = vmatprep.subr.bf16.mxu0 0
    %1758 = vmatpush1.bf16.msra.mxu0 0
    %1759 = vmatprep.subr.bf16.mxu0 0
    %1760 = vmatpush1.bf16.msra.mxu0 0
    %1761 = vmatprep.subr.bf16.mxu0 0
    %1762 = vmatpush1.bf16.msra.mxu0 0
    %1763 = vmatprep.subr.bf16.mxu0 0
    %1764 = vmatpush1.bf16.msra.mxu0 0
    %1765 = vmatprep.subr.bf16.mxu0 0
    %1766 = vmatpush1.bf16.msra.mxu0 0
    %1767 = vmatprep.subr.bf16.mxu0 0
    %1768 = vmatpush1.bf16.msra.mxu0 0
    %1769 = vmatprep.subr.bf16.mxu0 0
    %1770 = vmatpush1.bf16.msra.mxu0 0
    %1771 = vmatprep.subr.bf16.mxu0 0
    %1772 = vmatpush1.bf16.msra.mxu0 0
    %1773 = vmatprep.subr.bf16.mxu0 0
    %1774 = vmatpush1.bf16.msra.mxu0 0
    %1775 = vmatprep.subr.bf16.mxu0 0
    %1776 = vmatpush1.bf16.msra.mxu0 0
    %1777 = vmatprep.subr.bf16.mxu0 0
    %1778 = vmatpush1.bf16.msra.mxu0 0
    %1779 = vmatprep.subr.bf16.mxu0 0
    %1780 = vmatpush1.bf16.msra.mxu0 0
    %1781 = vmatprep.mubr.bf16.mxu0 0
    %1782 = vmatmul.mubr.bf16.gmra.mrb[0].mxu0 %v1744
    %v1783 = vpop.f32.mrb[0].mxu0
    %v1784 = vadd.f32 0.0, %v1783
    %v1785 = vpop.f32.mrb[0].mxu0
    %v1786 = vpop.f32.mrb[0].mxu0
    %v1787 = vpop.f32.mrb[0].mxu0
    %1788 = vdwg.mxu0
    %1790 = vrot.lane.b32.xlu0 %v362, 96
    %v1791 = vpop.permute.xlu0 %1790
    %v1793 = vsel %vm1105, %v1292, 0
    %v1796 = vsel %vm1304, %v1791, 0
    %1798 = vmatprep.subr.bf16.mxu0 0
    %1799 = vmatpush1.bf16.msra.mxu0 %v1796
    %1800 = vmatprep.subr.bf16.mxu0 0
    %1801 = vmatpush1.bf16.msra.mxu0 0
    %1802 = vmatprep.subr.bf16.mxu0 0
    %1803 = vmatpush1.bf16.msra.mxu0 0
    %1804 = vmatprep.subr.bf16.mxu0 0
    %1805 = vmatpush1.bf16.msra.mxu0 0
    %1806 = vmatprep.subr.bf16.mxu0 0
    %1807 = vmatpush1.bf16.msra.mxu0 0
    %1808 = vmatprep.subr.bf16.mxu0 0
    %1809 = vmatpush1.bf16.msra.mxu0 0
    %1810 = vmatprep.subr.bf16.mxu0 0
    %1811 = vmatpush1.bf16.msra.mxu0 0
    %1812 = vmatprep.subr.bf16.mxu0 0
    %1813 = vmatpush1.bf16.msra.mxu0 0
    %1814 = vmatprep.subr.bf16.mxu0 0
    %1815 = vmatpush1.bf16.msra.mxu0 0
    %1816 = vmatprep.subr.bf16.mxu0 0
    %1817 = vmatpush1.bf16.msra.mxu0 0
    %1818 = vmatprep.subr.bf16.mxu0 0
    %1819 = vmatpush1.bf16.msra.mxu0 0
    %1820 = vmatprep.subr.bf16.mxu0 0
    %1821 = vmatpush1.bf16.msra.mxu0 0
    %1822 = vmatprep.subr.bf16.mxu0 0
    %1823 = vmatpush1.bf16.msra.mxu0 0
    %1824 = vmatprep.subr.bf16.mxu0 0
    %1825 = vmatpush1.bf16.msra.mxu0 0
    %1826 = vmatprep.subr.bf16.mxu0 0
    %1827 = vmatpush1.bf16.msra.mxu0 0
    %1828 = vmatprep.subr.bf16.mxu0 0
    %1829 = vmatpush1.bf16.msra.mxu0 0
    %1830 = vmatprep.mubr.bf16.mxu0 0
    %1831 = vmatmul.mubr.bf16.gmra.mrb[0].mxu0 %v1793
    %v1832 = vpop.f32.mrb[0].mxu0
    %v1833 = vadd.f32 0.0, %v1832
    %v1834 = vpop.f32.mrb[0].mxu0
    %v1835 = vpop.f32.mrb[0].mxu0
    %v1836 = vpop.f32.mrb[0].mxu0
    %1837 = vdwg.mxu0
    %1839 = vrot.lane.b32.xlu0 %v363, 96
    %v1840 = vpop.permute.xlu0 %1839
    %v1842 = vsel %vm1105, %v1293, 0
    %v1845 = vsel %vm1304, %v1840, 0
    %1847 = vmatprep.subr.bf16.mxu0 0
    %1848 = vmatpush1.bf16.msra.mxu0 %v1845
    %1849 = vmatprep.subr.bf16.mxu0 0
    %1850 = vmatpush1.bf16.msra.mxu0 0
    %1851 = vmatprep.subr.bf16.mxu0 0
    %1852 = vmatpush1.bf16.msra.mxu0 0
    %1853 = vmatprep.subr.bf16.mxu0 0
    %1854 = vmatpush1.bf16.msra.mxu0 0
    %1855 = vmatprep.subr.bf16.mxu0 0
    %1856 = vmatpush1.bf16.msra.mxu0 0
    %1857 = vmatprep.subr.bf16.mxu0 0
    %1858 = vmatpush1.bf16.msra.mxu0 0
    %1859 = vmatprep.subr.bf16.mxu0 0
    %1860 = vmatpush1.bf16.msra.mxu0 0
    %1861 = vmatprep.subr.bf16.mxu0 0
    %1862 = vmatpush1.bf16.msra.mxu0 0
    %1863 = vmatprep.subr.bf16.mxu0 0
    %1864 = vmatpush1.bf16.msra.mxu0 0
    %1865 = vmatprep.subr.bf16.mxu0 0
    %1866 = vmatpush1.bf16.msra.mxu0 0
    %1867 = vmatprep.subr.bf16.mxu0 0
    %1868 = vmatpush1.bf16.msra.mxu0 0
    %1869 = vmatprep.subr.bf16.mxu0 0
    %1870 = vmatpush1.bf16.msra.mxu0 0
    %1871 = vmatprep.subr.bf16.mxu0 0
    %1872 = vmatpush1.bf16.msra.mxu0 0
    %1873 = vmatprep.subr.bf16.mxu0 0
    %1874 = vmatpush1.bf16.msra.mxu0 0
    %1875 = vmatprep.subr.bf16.mxu0 0
    %1876 = vmatpush1.bf16.msra.mxu0 0
    %1877 = vmatprep.subr.bf16.mxu0 0
    %1878 = vmatpush1.bf16.msra.mxu0 0
    %1879 = vmatprep.mubr.bf16.mxu0 0
    %1880 = vmatmul.mubr.bf16.gmra.mrb[0].mxu0 %v1842
    %v1881 = vpop.f32.mrb[0].mxu0
    %v1882 = vadd.f32 0.0, %v1881
    %v1883 = vpop.f32.mrb[0].mxu0
    %v1884 = vpop.f32.mrb[0].mxu0
    %v1885 = vpop.f32.mrb[0].mxu0
    %1886 = vdwg.mxu0
    %1888 = vrot.lane.b32.xlu0 %v364, 96
    %v1889 = vpop.permute.xlu0 %1888
    %v1891 = vsel %vm1105, %v1294, 0
    %v1894 = vsel %vm1304, %v1889, 0
    %1896 = vmatprep.subr.bf16.mxu0 0
    %1897 = vmatpush1.bf16.msra.mxu0 %v1894
    %1898 = vmatprep.subr.bf16.mxu0 0
    %1899 = vmatpush1.bf16.msra.mxu0 0
    %1900 = vmatprep.subr.bf16.mxu0 0
    %1901 = vmatpush1.bf16.msra.mxu0 0
    %1902 = vmatprep.subr.bf16.mxu0 0
    %1903 = vmatpush1.bf16.msra.mxu0 0
    %1904 = vmatprep.subr.bf16.mxu0 0
    %1905 = vmatpush1.bf16.msra.mxu0 0
    %1906 = vmatprep.subr.bf16.mxu0 0
    %1907 = vmatpush1.bf16.msra.mxu0 0
    %1908 = vmatprep.subr.bf16.mxu0 0
    %1909 = vmatpush1.bf16.msra.mxu0 0
    %1910 = vmatprep.subr.bf16.mxu0 0
    %1911 = vmatpush1.bf16.msra.mxu0 0
    %1912 = vmatprep.subr.bf16.mxu0 0
    %1913 = vmatpush1.bf16.msra.mxu0 0
    %1914 = vmatprep.subr.bf16.mxu0 0
    %1915 = vmatpush1.bf16.msra.mxu0 0
    %1916 = vmatprep.subr.bf16.mxu0 0
    %1917 = vmatpush1.bf16.msra.mxu0 0
    %1918 = vmatprep.subr.bf16.mxu0 0
    %1919 = vmatpush1.bf16.msra.mxu0 0
    %1920 = vmatprep.subr.bf16.mxu0 0
    %1921 = vmatpush1.bf16.msra.mxu0 0
    %1922 = vmatprep.subr.bf16.mxu0 0
    %1923 = vmatpush1.bf16.msra.mxu0 0
    %1924 = vmatprep.subr.bf16.mxu0 0
    %1925 = vmatpush1.bf16.msra.mxu0 0
    %1926 = vmatprep.subr.bf16.mxu0 0
    %1927 = vmatpush1.bf16.msra.mxu0 0
    %1928 = vmatprep.mubr.bf16.mxu0 0
    %1929 = vmatmul.mubr.bf16.gmra.mrb[0].mxu0 %v1891
    %v1930 = vpop.f32.mrb[0].mxu0
    %v1931 = vadd.f32 0.0, %v1930
    %v1932 = vpop.f32.mrb[0].mxu0
    %v1933 = vpop.f32.mrb[0].mxu0
    %v1934 = vpop.f32.mrb[0].mxu0
    %1935 = vdwg.mxu0
    %1937 = vrot.lane.b32.xlu0 %v365, 96
    %v1938 = vpop.permute.xlu0 %1937
    %v1940 = vsel %vm1105, %v1295, 0
    %v1943 = vsel %vm1304, %v1938, 0
    %1945 = vmatprep.subr.bf16.mxu0 0
    %1946 = vmatpush1.bf16.msra.mxu0 %v1943
    %1947 = vmatprep.subr.bf16.mxu0 0
    %1948 = vmatpush1.bf16.msra.mxu0 0
    %1949 = vmatprep.subr.bf16.mxu0 0
    %1950 = vmatpush1.bf16.msra.mxu0 0
    %1951 = vmatprep.subr.bf16.mxu0 0
    %1952 = vmatpush1.bf16.msra.mxu0 0
    %1953 = vmatprep.subr.bf16.mxu0 0
    %1954 = vmatpush1.bf16.msra.mxu0 0
    %1955 = vmatprep.subr.bf16.mxu0 0
    %1956 = vmatpush1.bf16.msra.mxu0 0
    %1957 = vmatprep.subr.bf16.mxu0 0
    %1958 = vmatpush1.bf16.msra.mxu0 0
    %1959 = vmatprep.subr.bf16.mxu0 0
    %1960 = vmatpush1.bf16.msra.mxu0 0
    %1961 = vmatprep.subr.bf16.mxu0 0
    %1962 = vmatpush1.bf16.msra.mxu0 0
    %1963 = vmatprep.subr.bf16.mxu0 0
    %1964 = vmatpush1.bf16.msra.mxu0 0
    %1965 = vmatprep.subr.bf16.mxu0 0
    %1966 = vmatpush1.bf16.msra.mxu0 0
    %1967 = vmatprep.subr.bf16.mxu0 0
    %1968 = vmatpush1.bf16.msra.mxu0 0
    %1969 = vmatprep.subr.bf16.mxu0 0
    %1970 = vmatpush1.bf16.msra.mxu0 0
    %1971 = vmatprep.subr.bf16.mxu0 0
    %1972 = vmatpush1.bf16.msra.mxu0 0
    %1973 = vmatprep.subr.bf16.mxu0 0
    %1974 = vmatpush1.bf16.msra.mxu0 0
    %1975 = vmatprep.subr.bf16.mxu0 0
    %1976 = vmatpush1.bf16.msra.mxu0 0
    %1977 = vmatprep.mubr.bf16.mxu0 0
    %1978 = vmatmul.mubr.bf16.gmra.mrb[0].mxu0 %v1940
    %v1979 = vpop.f32.mrb[0].mxu0
    %v1980 = vadd.f32 0.0, %v1979
    %v1981 = vpop.f32.mrb[0].mxu0
    %v1982 = vpop.f32.mrb[0].mxu0
    %v1983 = vpop.f32.mrb[0].mxu0
    %1984 = vdwg.mxu0
    %1986 = vrot.lane.b32.xlu0 %v366, 96
    %v1987 = vpop.permute.xlu0 %1986
    %v1989 = vsel %vm1105, %v1296, 0
    %v1992 = vsel %vm1304, %v1987, 0
    %1994 = vmatprep.subr.bf16.mxu0 0
    %1995 = vmatpush1.bf16.msra.mxu0 %v1992
    %1996 = vmatprep.subr.bf16.mxu0 0
    %1997 = vmatpush1.bf16.msra.mxu0 0
    %1998 = vmatprep.subr.bf16.mxu0 0
    %1999 = vmatpush1.bf16.msra.mxu0 0
    %2000 = vmatprep.subr.bf16.mxu0 0
    %2001 = vmatpush1.bf16.msra.mxu0 0
    %2002 = vmatprep.subr.bf16.mxu0 0
    %2003 = vmatpush1.bf16.msra.mxu0 0
    %2004 = vmatprep.subr.bf16.mxu0 0
    %2005 = vmatpush1.bf16.msra.mxu0 0
    %2006 = vmatprep.subr.bf16.mxu0 0
    %2007 = vmatpush1.bf16.msra.mxu0 0
    %2008 = vmatprep.subr.bf16.mxu0 0
    %2009 = vmatpush1.bf16.msra.mxu0 0
    %2010 = vmatprep.subr.bf16.mxu0 0
    %2011 = vmatpush1.bf16.msra.mxu0 0
    %2012 = vmatprep.subr.bf16.mxu0 0
    %2013 = vmatpush1.bf16.msra.mxu0 0
    %2014 = vmatprep.subr.bf16.mxu0 0
    %2015 = vmatpush1.bf16.msra.mxu0 0
    %2016 = vmatprep.subr.bf16.mxu0 0
    %2017 = vmatpush1.bf16.msra.mxu0 0
    %2018 = vmatprep.subr.bf16.mxu0 0
    %2019 = vmatpush1.bf16.msra.mxu0 0
    %2020 = vmatprep.subr.bf16.mxu0 0
    %2021 = vmatpush1.bf16.msra.mxu0 0
    %2022 = vmatprep.subr.bf16.mxu0 0
    %2023 = vmatpush1.bf16.msra.mxu0 0
    %2024 = vmatprep.subr.bf16.mxu0 0
    %2025 = vmatpush1.bf16.msra.mxu0 0
    %2026 = vmatprep.mubr.bf16.mxu0 0
    %2027 = vmatmul.mubr.bf16.gmra.mrb[0].mxu0 %v1989
    %v2028 = vpop.f32.mrb[0].mxu0
    %v2029 = vadd.f32 0.0, %v2028
    %v2030 = vpop.f32.mrb[0].mxu0
    %v2031 = vpop.f32.mrb[0].mxu0
    %v2032 = vpop.f32.mrb[0].mxu0
    %2033 = vdwg.mxu0
    %2035 = vrot.lane.b32.xlu0 %v367, 96
    %v2036 = vpop.permute.xlu0 %2035
    %v2038 = vsel %vm1105, %v1297, 0
    %v2041 = vsel %vm1304, %v2036, 0
    %2043 = vmatprep.subr.bf16.mxu0 0
    %2044 = vmatpush1.bf16.msra.mxu0 %v2041
    %2045 = vmatprep.subr.bf16.mxu0 0
    %2046 = vmatpush1.bf16.msra.mxu0 0
    %2047 = vmatprep.subr.bf16.mxu0 0
    %2048 = vmatpush1.bf16.msra.mxu0 0
    %2049 = vmatprep.subr.bf16.mxu0 0
    %2050 = vmatpush1.bf16.msra.mxu0 0
    %2051 = vmatprep.subr.bf16.mxu0 0
    %2052 = vmatpush1.bf16.msra.mxu0 0
    %2053 = vmatprep.subr.bf16.mxu0 0
    %2054 = vmatpush1.bf16.msra.mxu0 0
    %2055 = vmatprep.subr.bf16.mxu0 0
    %2056 = vmatpush1.bf16.msra.mxu0 0
    %2057 = vmatprep.subr.bf16.mxu0 0
    %2058 = vmatpush1.bf16.msra.mxu0 0
    %2059 = vmatprep.subr.bf16.mxu0 0
    %2060 = vmatpush1.bf16.msra.mxu0 0
    %2061 = vmatprep.subr.bf16.mxu0 0
    %2062 = vmatpush1.bf16.msra.mxu0 0
    %2063 = vmatprep.subr.bf16.mxu0 0
    %2064 = vmatpush1.bf16.msra.mxu0 0
    %2065 = vmatprep.subr.bf16.mxu0 0
    %2066 = vmatpush1.bf16.msra.mxu0 0
    %2067 = vmatprep.subr.bf16.mxu0 0
    %2068 = vmatpush1.bf16.msra.mxu0 0
    %2069 = vmatprep.subr.bf16.mxu0 0
    %2070 = vmatpush1.bf16.msra.mxu0 0
    %2071 = vmatprep.subr.bf16.mxu0 0
    %2072 = vmatpush1.bf16.msra.mxu0 0
    %2073 = vmatprep.subr.bf16.mxu0 0
    %2074 = vmatpush1.bf16.msra.mxu0 0
    %2075 = vmatprep.mubr.bf16.mxu0 0
    %2076 = vmatmul.mubr.bf16.gmra.mrb[0].mxu0 %v2038
    %v2077 = vpop.f32.mrb[0].mxu0
    %v2078 = vadd.f32 0.0, %v2077
    %v2079 = vpop.f32.mrb[0].mxu0
    %v2080 = vpop.f32.mrb[0].mxu0
    %v2081 = vpop.f32.mrb[0].mxu0
    %2082 = vdwg.mxu0
    %2085 = vrot.lane.b32.xlu0 %v1441, 4
    %v2086 = vpop.permute.xlu0 %2085
    %2087 = vrot.lane.b32.xlu0 %v1490, 4
    %v2088 = vpop.permute.xlu0 %2087
    %2093 = vrot.lane.b32.xlu0 %v1539, 8
    %v2094 = vpop.permute.xlu0 %2093
    %2095 = vrot.lane.b32.xlu0 %v1588, 8
    %v2096 = vpop.permute.xlu0 %2095
    %2101 = vrot.lane.b32.xlu0 %v1637, 12
    %v2102 = vpop.permute.xlu0 %2101
    %2103 = vrot.lane.b32.xlu0 %v1686, 12
    %v2104 = vpop.permute.xlu0 %2103
    %2109 = vrot.lane.b32.xlu0 %v1735, 16
    %v2110 = vpop.permute.xlu0 %2109
    %2111 = vrot.lane.b32.xlu0 %v1784, 16
    %v2112 = vpop.permute.xlu0 %2111
    %2117 = vrot.lane.b32.xlu0 %v1833, 20
    %v2118 = vpop.permute.xlu0 %2117
    %2119 = vrot.lane.b32.xlu0 %v1882, 20
    %v2120 = vpop.permute.xlu0 %2119
    %2125 = vrot.lane.b32.xlu0 %v1931, 24
    %v2126 = vpop.permute.xlu0 %2125
    %2127 = vrot.lane.b32.xlu0 %v1980, 24
    %v2128 = vpop.permute.xlu0 %2127
    %2133 = vrot.lane.b32.xlu0 %v2029, 28
    %v2134 = vpop.permute.xlu0 %2133
    %2135 = vrot.lane.b32.xlu0 %v2078, 28
    %v2136 = vpop.permute.xlu0 %2135
    %v2139 = vsel %vm368, %v1343, %v2086
    %v2140 = vsel %vm368, %v1392, %v2088
    %v2141 = vsel %vm1105, %v2139, %v2094
    %v2142 = vsel %vm1105, %v2140, %v2096
    %vm2143 = vcmask 97280
    %v2144 = vsel %vm2143, %v2141, %v2102
    %v2145 = vsel %vm2143, %v2142, %v2104
    %vm2146 = vcmask 130048
    %v2147 = vsel %vm2146, %v2144, %v2110
    %v2148 = vsel %vm2146, %v2145, %v2112
    %vm2149 = vcmask 162816
    %v2150 = vsel %vm2149, %v2147, %v2118
    %v2151 = vsel %vm2149, %v2148, %v2120
    %vm2152 = vcmask 195584
    %v2153 = vsel %vm2152, %v2150, %v2126
    %v2154 = vsel %vm2152, %v2151, %v2128
    %vm2155 = vcmask 228352
    %v2156 = vsel %vm2155, %v2153, %v2134
    %v2157 = vsel %vm2155, %v2154, %v2136
    %v2158 = vpack.c.bf16 %v2157, %v2156
    %v2159 = vld [vmem:[#allocation7] sm:$0xf]
    %v2160 = vld [vmem:[#allocation7 + $0x8] sm:$0xf]
    %v2161 = vld [vmem:[#allocation7 + $0x10] sm:$0xf]
    %v2162 = vld [vmem:[#allocation7 + $0x18] sm:$0xf]
    %v2163 = vlaneseq
    %v2164 = vshrl.u32 %v2163, 7
    %v2165 = vsub.s32 2, %v2164
    %v2166 = vrot.slane %v66, %v2165
    %v2171 = vunpack.c.l.b16 %v2159
    %v2172 = vunpack.c.l.b16 %v2160
    %v2173 = vunpack.c.l.b16 %v2161
    %v2174 = vunpack.c.l.b16 %v2162
    %v2175 = vpack.c.b16 %v2172, %v2171
    %v2176 = vpack.c.b16 %v2174, %v2173
    %2177 = vrot.lane.b32.xlu0 %v2175, 32
    %v2178 = vpop.permute.xlu0 %2177
    %2179 = vrot.lane.b32.xlu0 %v2176, 32
    %v2180 = vpop.permute.xlu0 %2179
    %v2184 = vsel %vm87, %v2158, 0
    %2186 = vmatprep.subr.bf16.mxu0 0
    %2187 = vmatpush1.bf16.msra.mxu0 %v2178
    %2188 = vmatprep.subr.bf16.mxu0 0
    %2189 = vmatpush1.bf16.msra.mxu0 %v2180
    %2190 = vmatprep.subr.bf16.mxu0 0
    %2191 = vmatpush1.bf16.msra.mxu0 0
    %2192 = vmatprep.subr.bf16.mxu0 0
    %2193 = vmatpush1.bf16.msra.mxu0 0
    %2194 = vmatprep.subr.bf16.mxu0 0
    %2195 = vmatpush1.bf16.msra.mxu0 0
    %2196 = vmatprep.subr.bf16.mxu0 0
    %2197 = vmatpush1.bf16.msra.mxu0 0
    %2198 = vmatprep.subr.bf16.mxu0 0
    %2199 = vmatpush1.bf16.msra.mxu0 0
    %2200 = vmatprep.subr.bf16.mxu0 0
    %2201 = vmatpush1.bf16.msra.mxu0 0
    %2202 = vmatprep.subr.bf16.mxu0 0
    %2203 = vmatpush1.bf16.msra.mxu0 0
    %2204 = vmatprep.subr.bf16.mxu0 0
    %2205 = vmatpush1.bf16.msra.mxu0 0
    %2206 = vmatprep.subr.bf16.mxu0 0
    %2207 = vmatpush1.bf16.msra.mxu0 0
    %2208 = vmatprep.subr.bf16.mxu0 0
    %2209 = vmatpush1.bf16.msra.mxu0 0
    %2210 = vmatprep.subr.bf16.mxu0 0
    %2211 = vmatpush1.bf16.msra.mxu0 0
    %2212 = vmatprep.subr.bf16.mxu0 0
    %2213 = vmatpush1.bf16.msra.mxu0 0
    %2214 = vmatprep.subr.bf16.mxu0 0
    %2215 = vmatpush1.bf16.msra.mxu0 0
    %2216 = vmatprep.subr.bf16.mxu0 0
    %2217 = vmatpush1.bf16.msra.mxu0 0
    %2218 = vmatprep.mubr.bf16.mxu0 0
    %2219 = vmatmul.mubr.bf16.gmra.mrb[0].mxu0 %v2184
    %v2220 = vpop.f32.mrb[0].mxu0
    %v2221 = vadd.f32 %v2166, %v2220
    %v2222 = vpop.f32.mrb[0].mxu0
    %v2223 = vpop.f32.mrb[0].mxu0
    %v2224 = vadd.f32 %v2166, %v2223
    %v2225 = vpop.f32.mrb[0].mxu0
    %2226 = vdwg.mxu0
    %v2227 = vpack.c.bf16 %v2224, %v2221
    %v2228 = vld [vmem:[#allocation7 + $0x4] sm:$0xf]
    %v2229 = vld [vmem:[#allocation7 + $0xc] sm:$0xf]
    %v2230 = vld [vmem:[#allocation7 + $0x14] sm:$0xf]
    %v2231 = vld [vmem:[#allocation7 + $0x1c] sm:$0xf]
    %v2232 = vlaneseq
    %v2233 = vshrl.u32 %v2232, 7
    %v2234 = vsub.s32 3, %v2233
    %v2235 = vrot.slane %v66, %v2234
    %v2240 = vunpack.c.l.b16 %v2228
    %v2241 = vunpack.c.l.b16 %v2229
    %v2242 = vunpack.c.l.b16 %v2230
    %v2243 = vunpack.c.l.b16 %v2231
    %v2244 = vpack.c.b16 %v2241, %v2240
    %v2245 = vpack.c.b16 %v2243, %v2242
    %v2249 = vsel %vm87, %v2227, 0
    %2251 = vmatprep.subr.bf16.mxu0 0
    %2252 = vmatpush1.bf16.msra.mxu0 %v2244
    %2253 = vmatprep.subr.bf16.mxu0 0
    %2254 = vmatpush1.bf16.msra.mxu0 %v2245
    %2255 = vmatprep.subr.bf16.mxu0 0
    %2256 = vmatpush1.bf16.msra.mxu0 0
    %2257 = vmatprep.subr.bf16.mxu0 0
    %2258 = vmatpush1.bf16.msra.mxu0 0
    %2259 = vmatprep.subr.bf16.mxu0 0
    %2260 = vmatpush1.bf16.msra.mxu0 0
    %2261 = vmatprep.subr.bf16.mxu0 0
    %2262 = vmatpush1.bf16.msra.mxu0 0
    %2263 = vmatprep.subr.bf16.mxu0 0
    %2264 = vmatpush1.bf16.msra.mxu0 0
    %2265 = vmatprep.subr.bf16.mxu0 0
    %2266 = vmatpush1.bf16.msra.mxu0 0
    %2267 = vmatprep.subr.bf16.mxu0 0
    %2268 = vmatpush1.bf16.msra.mxu0 0
    %2269 = vmatprep.subr.bf16.mxu0 0
    %2270 = vmatpush1.bf16.msra.mxu0 0
    %2271 = vmatprep.subr.bf16.mxu0 0
    %2272 = vmatpush1.bf16.msra.mxu0 0
    %2273 = vmatprep.subr.bf16.mxu0 0
    %2274 = vmatpush1.bf16.msra.mxu0 0
    %2275 = vmatprep.subr.bf16.mxu0 0
    %2276 = vmatpush1.bf16.msra.mxu0 0
    %2277 = vmatprep.subr.bf16.mxu0 0
    %2278 = vmatpush1.bf16.msra.mxu0 0
    %2279 = vmatprep.subr.bf16.mxu0 0
    %2280 = vmatpush1.bf16.msra.mxu0 0
    %2281 = vmatprep.subr.bf16.mxu0 0
    %2282 = vmatpush1.bf16.msra.mxu0 0
    %2283 = vmatprep.mubr.bf16.mxu0 0
    %2284 = vmatmul.mubr.bf16.gmra.mrb[0].mxu0 %v2249
    %v2285 = vpop.f32.mrb[0].mxu0
    %v2286 = vadd.f32 %v2235, %v2285
    %v2287 = vpop.f32.mrb[0].mxu0
    %v2288 = vpop.f32.mrb[0].mxu0
    %v2289 = vadd.f32 %v2235, %v2288
    %v2290 = vpop.f32.mrb[0].mxu0
    %2291 = vdwg.mxu0
    %v2292 = vmax.f32 %v2286, 0.0
    %v2293 = vmax.f32 %v2289, 0.0
    %v2294 = vpack.c.bf16 %v2293, %v2292
    %v2295 = vlaneseq
    %v2296 = vshrl.u32 %v2295, 7
    %v2297 = vsub.s32 4, %v2296
    %v2298 = vrot.slane %v66, %v2297
    %2299 = vrot.lane.b32.xlu0 %v2244, 96
    %v2300 = vpop.permute.xlu0 %2299
    %2301 = vrot.lane.b32.xlu0 %v2245, 96
    %v2302 = vpop.permute.xlu0 %2301
    %v2306 = vsel %vm87, %v2294, 0
    %2308 = vmatprep.subr.bf16.mxu0 0
    %2309 = vmatpush1.bf16.msra.mxu0 %v2300
    %2310 = vmatprep.subr.bf16.mxu0 0
    %2311 = vmatpush1.bf16.msra.mxu0 %v2302
    %2312 = vmatprep.subr.bf16.mxu0 0
    %2313 = vmatpush1.bf16.msra.mxu0 0
    %2314 = vmatprep.subr.bf16.mxu0 0
    %2315 = vmatpush1.bf16.msra.mxu0 0
    %2316 = vmatprep.subr.bf16.mxu0 0
    %2317 = vmatpush1.bf16.msra.mxu0 0
    %2318 = vmatprep.subr.bf16.mxu0 0
    %2319 = vmatpush1.bf16.msra.mxu0 0
    %2320 = vmatprep.subr.bf16.mxu0 0
    %2321 = vmatpush1.bf16.msra.mxu0 0
    %2322 = vmatprep.subr.bf16.mxu0 0
    %2323 = vmatpush1.bf16.msra.mxu0 0
    %2324 = vmatprep.subr.bf16.mxu0 0
    %2325 = vmatpush1.bf16.msra.mxu0 0
    %2326 = vmatprep.subr.bf16.mxu0 0
    %2327 = vmatpush1.bf16.msra.mxu0 0
    %2328 = vmatprep.subr.bf16.mxu0 0
    %2329 = vmatpush1.bf16.msra.mxu0 0
    %2330 = vmatprep.subr.bf16.mxu0 0
    %2331 = vmatpush1.bf16.msra.mxu0 0
    %2332 = vmatprep.subr.bf16.mxu0 0
    %2333 = vmatpush1.bf16.msra.mxu0 0
    %2334 = vmatprep.subr.bf16.mxu0 0
    %2335 = vmatpush1.bf16.msra.mxu0 0
    %2336 = vmatprep.subr.bf16.mxu0 0
    %2337 = vmatpush1.bf16.msra.mxu0 0
    %2338 = vmatprep.subr.bf16.mxu0 0
    %2339 = vmatpush1.bf16.msra.mxu0 0
    %2340 = vmatprep.mubr.bf16.mxu0 0
    %2341 = vmatmul.mubr.bf16.gmra.mrb[0].mxu0 %v2306
    %v2342 = vpop.f32.mrb[0].mxu0
    %v2343 = vadd.f32 %v2298, %v2342
    %v2344 = vpop.f32.mrb[0].mxu0
    %v2345 = vpop.f32.mrb[0].mxu0
    %v2346 = vadd.f32 %v2298, %v2345
    %v2347 = vpop.f32.mrb[0].mxu0
    %2348 = vdwg.mxu0
    %v2349 = vsub.f32 0.0, %v2343
    %v2350 = vsub.f32 0.0, %v2346
    %v2351 = vmul.f32 %v2349, 1.442695
    %v2352 = vpow.pop %v2351
    %v2353 = vmul.f32 %v2350, 1.442695
    %v2354 = vpow.pop %v2353
    %v2355 = vadd.f32 %v2352, 1.0
    %v2356 = vadd.f32 %v2354, 1.0
    %v2357 = vrcp.pop %v2355
    %v2358 = vrcp.pop %v2356
    %v2359 = vadd.f32 %v2357, 1.0
    %v2360 = vadd.f32 %v2358, 1.0
    %v2361 = vmul.f32 %v60, %v2359
    %v2362 = vmul.f32 %v61, %v2360
    %2363 = vst.msk [vmem:[#allocation8] sm:$0xff] %vm87, %v2361
    %2364 = vst.msk [vmem:[#allocation8 + $0x8] sm:$0xff] %vm87, %v2362
    // Predicated region
    $region30: #{tpu_custom_call.1} parent=1 // pred_check
      _
    $region31: #{tpu_custom_call.1} parent=1 // pred_check_branch
      %2366 = sbr.rel (0) target = $region33
    $region32: #{tpu_custom_call.1} parent=1 // pred_region
      %s2368 = ssub.s32 256, 256
      %2369 = vsyncadd [#allocation4], %s2368
      %s2370 = sshll.u32 [#allocation8], 4
      %s2371 = int_to_ptr.vmem [resolvable:$true] %s2370
      %2376 = dma.vmem_to_hbm [thread:$0]  %s2371, 256, %s4, [#allocation4], 128, 128, 8
    $region33: #{tpu_custom_call.1} parent=1 // pred_fallthru
      _
    // Predicated region
    $region34: #{tpu_custom_call.1} parent=1 // pred_check
      _
    $region35: #{tpu_custom_call.1} parent=1 // pred_check_branch
      %2378 = sbr.rel (0) target = $region37
    $region36: #{tpu_custom_call.1} parent=1 // pred_region
      %2379 = dma.done [#allocation4], 256
    $region37: #{tpu_custom_call.1} parent=1 // pred_fallthru
      _
    %2380 = vsyncpa [#allocation3], 1
    %2381 = vsyncpa [#allocation6], 1
    %2382 = vsyncpa [#allocation4], 1

</llo_original>
